<compile_context>
chip_gen: v7x
topology: tpu7x:2x2x1
jax: 0.10.0
libtpu: 0.0.40
codegen_flags: <defaults>
</compile_context>

<pallas_src>
import functools

import jax
import jax.numpy as jnp
import numpy as np
from jax.experimental import pallas as pl
from jax.experimental.pallas import tpu as pltpu


def _vmem_limit(estimate_bytes):
    """Scoped-VMEM request: cover the pipeline (+headroom), stay < v7x 64 MiB."""
    return int(min(max(estimate_bytes + (8 << 20), 32 << 20), 56 << 20))


# --------------------------------------------------------------------------
# Kernel 1: EstimatorCV.update_CV — per-present-class covariance update.
# grid=(U,) over slots; slot u handles class slot_ref[u].  All slot classes are
# distinct; absent-class slots compute count==0 and write cov_prev back
# unchanged.  cov_prev is aliased to the output, so classes not covered by any
# slot keep their previous covariance without any HBM traffic.
# --------------------------------------------------------------------------
def _update_cv_kernel(slot_ref, feat_ref, lbl_ref, covp_ref, avep_ref, amtp_ref,
                      cov_out_ref):
    c = slot_ref[pl.program_id(0)]                          # class for this slot

    feats = feat_ref[...]                                   # (N, A), resident
    mask = jnp.where(lbl_ref[...] == c, 1.0, 0.0)           # (N, 1) class mask
    count = jnp.sum(mask)
    inv = 1.0 / jnp.maximum(count, 1.0)                     # Amount_CxA[==0] = 1

    masked = feats * mask                                   # features_by_sort
    ave = jnp.sum(masked, axis=0, keepdims=True) * inv      # ave_CxA (1, A)
    centered = masked - ave * mask                          # var_temp pre-bmm

    amt_prev = amtp_ref[c]
    denom = count + amt_prev
    w_cv = jnp.where(denom > 0.0, count / denom, 0.0)       # NaN -> 0

    # Fused Gram: [centered*(w_cv/amount) ; w_cv(1-w_cv)*diff]^T @ [centered ; diff]
    # = w_cv*var_temp + additional_CV in a single MXU pass (K = N + 8).
    A = feats.shape[1]
    diff = avep_ref[0] - ave                                # (1, A)  (Ave - ave)
    row0 = jax.lax.broadcasted_iota(jnp.int32, (8, A), 0) == 0
    lhs_tail = jnp.where(row0, diff * (w_cv * (1.0 - w_cv)), 0.0)
    rhs_tail = jnp.where(row0, diff, 0.0)
    lhs = jnp.concatenate([centered * (inv * w_cv), lhs_tail], axis=0)
    rhs = jnp.concatenate([centered, rhs_tail], axis=0)
    gram = jax.lax.dot_general(lhs, rhs, (((0,), (0,)), ((), ())),
                               preferred_element_type=jnp.float32)  # (A, A)

    cov_out_ref[0] = covp_ref[0] * (1.0 - w_cv) + gram


def update_cv(features, labels, slot_labels, cov_prev, ave_prev, amount_prev):
    N, A = features.shape
    C = cov_prev.shape[0]
    U = slot_labels.shape[0]
    labels_2d = labels.reshape(N, 1).astype(jnp.int32)
    ave_prev_3d = ave_prev.reshape(C, 1, A)

    # residents + double-buffered cov in/out blocks + in-kernel temps.
    est = 4 * (N * A + N + 5 * A * A + 2 * (N + 8) * A + 4 * A)
    return pl.pallas_call(
        _update_cv_kernel,
        out_shape=jax.ShapeDtypeStruct((C, A, A), jnp.float32),
        grid_spec=pltpu.PrefetchScalarGridSpec(
            num_scalar_prefetch=1,                           # slot_labels -> SMEM
            grid=(U,),
            in_specs=[
                pl.BlockSpec((N, A), lambda u, slot: (0, 0)),               # features
                pl.BlockSpec((N, 1), lambda u, slot: (0, 0)),               # labels
                pl.BlockSpec((1, A, A), lambda u, slot: (slot[u], 0, 0)),   # prev CoVariance
                pl.BlockSpec((1, 1, A), lambda u, slot: (slot[u], 0, 0)),   # prev Ave
                pl.BlockSpec(memory_space=pltpu.MemorySpace.SMEM),          # prev Amount (C,)
            ],
            out_specs=pl.BlockSpec((1, A, A), lambda u, slot: (slot[u], 0, 0)),
        ),
        # cov_prev is flat input index 3 (counting the scalar-prefetch operand);
        # aliasing it to output 0 makes untouched class blocks keep their value.
        input_output_aliases={3: 0},
        compiler_params=pltpu.CompilerParams(
            dimension_semantics=("parallel",),               # slots independent
            vmem_limit_bytes=_vmem_limit(est)),
    )(slot_labels, features, labels_2d, cov_prev, ave_prev_3d, amount_prev)


# --------------------------------------------------------------------------
# Kernel 2: per-slot sigma:  sigma_half[c] = 0.5*ratio*diag(D CV_c D^T)
# --------------------------------------------------------------------------
def _isda_sigma_small_kernel(slot_ref, w_ref, cv_ref, out_ref, *, scale, n_slots):
    # Small-problem path: single invocation, full CoVariance resident in VMEM,
    # lane-dense (U, C) output, unrolled loop over slots (no grid-step overhead).
    W = w_ref[...]                                          # (C, A), resident
    for u in range(n_slots):
        lbl = slot_ref[u]
        D = W - w_ref[pl.ds(lbl, 1), :]                     # (C, A)
        cv_u = cv_ref[pl.ds(lbl, 1), :, :]                  # (1, A, A)
        tmp = jnp.dot(D, cv_u[0], preferred_element_type=jnp.float32)
        sig = jnp.sum(tmp * D, axis=-1)                     # diag(D CV D^T), (C,)
        out_ref[pl.ds(u, 1), :] = (scale * sig).reshape(1, -1)


def _isda_sigma_kernel(slot_ref, w_ref, cv_ref, out_ref, *, scale, use_bf16):
    # Large-problem path: grid=(U,), CV[label] streamed per step; bf16 MXU
    # operands (f32 accumulate) once C is big enough to be MXU-bound.
    u = pl.program_id(0)
    lbl = slot_ref[u]                                       # scalar (SMEM prefetch)
    W = w_ref[...]                                          # (C, A), resident
    D = W - w_ref[pl.ds(lbl, 1), :]                         # (C, A)
    CV = cv_ref[0]                                          # (A, A)
    if use_bf16:
        tmp = jnp.dot(D.astype(jnp.bfloat16), CV.astype(jnp.bfloat16),
                      preferred_element_type=jnp.float32)
    else:
        tmp = jnp.dot(D, CV, preferred_element_type=jnp.float32)
    sig = jnp.sum(tmp * D, axis=-1)                         # (C,)
    out_ref[0] = (scale * sig).reshape(1, -1)


def isda_aug(fc_weight, y, slot_labels, inv_idx, cov, ratio):
    N, C = y.shape
    A = fc_weight.shape[1]
    U = slot_labels.shape[0]
    scale = 0.5 * float(ratio)

    small = (C * A * A * 4 <= (8 << 20)) and (U <= 32)
    if small:
        est = 4 * (C * A + C * A * A + U * C + 3 * C * A)
        kernel = functools.partial(_isda_sigma_small_kernel,
                                   scale=scale, n_slots=U)
        sig = pl.pallas_call(
            kernel,
            out_shape=jax.ShapeDtypeStruct((U, C), jnp.float32),
            grid=(1,),
            in_specs=[
                pl.BlockSpec(memory_space=pltpu.MemorySpace.SMEM),   # slot labels
                pl.BlockSpec((C, A), lambda i: (0, 0)),              # fc weight
                pl.BlockSpec((C, A, A), lambda i: (0, 0, 0)),        # full CoVariance
            ],
            out_specs=pl.BlockSpec((U, C), lambda i: (0, 0)),
            compiler_params=pltpu.CompilerParams(
                dimension_semantics=("arbitrary",),
                vmem_limit_bytes=_vmem_limit(est)),
        )(slot_labels, fc_weight, cov)
    else:
        est = 4 * (C * A + 2 * A * A + 2 * C + 3 * C * A)
        kernel = functools.partial(_isda_sigma_kernel,
                                   scale=scale, use_bf16=(C >= 128))
        sig3 = pl.pallas_call(
            kernel,
            out_shape=jax.ShapeDtypeStruct((U, 1, C), jnp.float32),
            grid_spec=pltpu.PrefetchScalarGridSpec(
                num_scalar_prefetch=1,                       # slot labels -> SMEM
                grid=(U,),
                in_specs=[
                    pl.BlockSpec((C, A), lambda u, slot: (0, 0)),            # weight
                    pl.BlockSpec((1, A, A), lambda u, slot: (slot[u], 0, 0)),  # CV[l]
                ],
                out_specs=pl.BlockSpec((1, 1, C), lambda u, slot: (u, 0, 0)),
            ),
            compiler_params=pltpu.CompilerParams(
                dimension_semantics=("parallel",),
                vmem_limit_bytes=_vmem_limit(est)),
        )(slot_labels, fc_weight, cov)
        sig = sig3.reshape(U, C)

    return y + sig[inv_idx]                                 # cheap JAX gather + add


# --------------------------------------------------------------------------
# Jitted forward: slot construction + both kernels + Ave/Amount state glue.
# cov (arg 4) is donated so the pallas input/output aliasing is truly in-place.
# --------------------------------------------------------------------------
@functools.partial(jax.jit, static_argnames=("ratio",), donate_argnums=(4,))
def isda_forward(y, features, fc_weight, labels, cov, ave, amount, ratio):
    N = features.shape[0]
    C = cov.shape[0]
    U = min(N, C)
    labels = labels.astype(jnp.int32)

    # Slot construction: U distinct classes, present classes in the first slots
    # (absent classes fill the remainder -> provable no-op updates).
    present = jnp.zeros((C,), jnp.bool_).at[labels].set(True)
    order = jnp.argsort(jnp.where(present, 0, 1).astype(jnp.int32)).astype(jnp.int32)
    slot_labels = order[:U]                                  # distinct classes
    rank = jnp.zeros((C,), jnp.int32).at[order].set(jnp.arange(C, dtype=jnp.int32))
    inv_idx = rank[labels]                                   # sample -> slot index

    # ---- update_CV (Pallas kernel over present-class slots, aliased output) ----
    new_cov = update_cv(features, labels, slot_labels, cov, ave, amount)

    # Ave / Amount state updates (plain-JAX glue; not used in the output)
    onehot = jax.nn.one_hot(labels, C, dtype=jnp.float32)
    counts = onehot.sum(0)
    amount_div = jnp.maximum(counts, 1.0)
    ave_cxa = (onehot.T @ features) / amount_div[:, None]
    denom = counts + amount
    w_av = jnp.where(denom > 0.0, counts / denom, 0.0)
    new_ave = ave * (1.0 - w_av[:, None]) + ave_cxa * w_av[:, None]
    new_amount = amount + counts

    # ---- isda_aug (Pallas sigma kernel over slots + JAX gather) ----
    aug_y = isda_aug(fc_weight, y, slot_labels, inv_idx, new_cov, ratio)
    return aug_y, new_cov, new_ave, new_amount


class ISDALoss:
    def __init__(self, feature_num, class_num):
        self.feature_num = feature_num
        self.class_num = class_num
        self.cov = jnp.zeros((class_num, feature_num, feature_num), jnp.float32)
        self.ave = jnp.zeros((class_num, feature_num), jnp.float32)
        self.amount = jnp.zeros((class_num,), jnp.float32)

    def forward(self, y, features, fc_weight, target_x, ratio):
        aug_y, self.cov, self.ave, self.amount = isda_forward(
            y, features, fc_weight, target_x, self.cov, self.ave, self.amount,
            ratio=float(ratio))
        return aug_y


# --------------------------------------------------------------------------
# Pure-JAX reference (mirrors the torch code) for correctness checking
# --------------------------------------------------------------------------
def reference_forward(y, features, weight, labels, ratio,
                      cov_prev, ave_prev, amount_prev):
    C = weight.shape[0]
    onehot = jax.nn.one_hot(labels, C, dtype=jnp.float32)
    counts = onehot.sum(0)
    amount_div = jnp.maximum(counts, 1.0)
    ave = jnp.einsum('nc,na->ca', onehot, features,
                     precision='highest') / amount_div[:, None]
    centered = onehot[:, :, None] * (features[:, None, :] - ave[None, :, :])
    var = jnp.einsum('nca,ncb->cab', centered, centered,
                     precision='highest') / amount_div[:, None, None]
    denom = counts + amount_prev
    w_cv = jnp.where(denom > 0.0, counts / denom, 0.0)
    diff = ave_prev - ave
    additional = (w_cv * (1.0 - w_cv))[:, None, None] * jnp.einsum(
        'ca,cb->cab', diff, diff, precision='highest')
    cov = cov_prev * (1.0 - w_cv)[:, None, None] + var * w_cv[:, None, None] \
        + additional
    D = weight[None, :, :] - weight[labels][:, None, :]
    CVt = cov[labels]
    sigma2 = ratio * jnp.einsum('nca,nab,ncb->nc', D, CVt, D,
                                precision='highest')
    return y + 0.5 * sigma2, cov


if __name__ == "__main__":
    N, A, C = 8, 32, 10        # batch, feature_num, class_num
    ratio = 0.5

    key = jax.random.PRNGKey(0)
    k1, k2 = jax.random.split(key, 2)
    features = jax.random.normal(k1, (N, A), jnp.float32)
    # deterministic init of nn.Linear(A, C).weight  -> shape (C, A)
    fc_weight = 0.1 * jax.random.normal(k2, (C, A), jnp.float32)
    y = jnp.dot(features, fc_weight.T, precision='highest')      # logits (N, C)
    # classes {0,1,3,5} present; {2,4,6,7} become fill slots; {8,9} untouched
    # (exercises absent-class no-op slots and aliased untouched cov blocks).
    labels = jnp.array([3, 1, 3, 0, 5, 1, 3, 0], dtype=jnp.int32)

    loss_mod = ISDALoss(A, C)
    aug_y = loss_mod.forward(y, features, fc_weight, labels, ratio)
    aug_y = jax.block_until_ready(aug_y)

    ref_aug, ref_cov = reference_forward(
        y, features, fc_weight, labels, ratio,
        jnp.zeros((C, A, A), jnp.float32),
        jnp.zeros((C, A), jnp.float32),
        jnp.zeros((C,), jnp.float32))
    np.testing.assert_allclose(np.asarray(aug_y), np.asarray(ref_aug),
                               rtol=1e-2, atol=1e-2)
    np.testing.assert_allclose(np.asarray(loss_mod.cov), np.asarray(ref_cov),
                               rtol=1e-2, atol=1e-2)
    print("KERNEL_OK")
</pallas_src>

<mosaic_0001>
module attributes {stable_mosaic.version = 11 : i64} {
  func.func @_update_cv_kernel(%arg0: i32, %arg1: memref<8xi32, #tpu.memory_space<smem>>, %arg2: memref<8x32xf32, #tpu.memory_space<vmem>>, %arg3: memref<8x1xi32, #tpu.memory_space<vmem>>, %arg4: memref<1x32x32xf32, #tpu.memory_space<vmem>>, %arg5: memref<1x1x32xf32, #tpu.memory_space<vmem>>, %arg6: memref<10xf32, #tpu.memory_space<smem>>, %arg7: memref<1x32x32xf32, #tpu.memory_space<vmem>>) attributes {dimension_semantics = [#tpu.dimension_semantics<parallel>], iteration_bounds = array<i64: 8>, scalar_prefetch = 1 : i64, scratch_operands = 0 : i64, tpu.core_type = #tpu.core_type<tc>, window_params = [{pipeline_mode = #tpu.pipeline_mode<synchronous>, transform_indices = @transform_0, window_bounds = array<i64: 8, 32>}, {pipeline_mode = #tpu.pipeline_mode<synchronous>, transform_indices = @transform_1, window_bounds = array<i64: 8, 1>}, {transform_indices = @transform_2, window_bounds = array<i64: 1, 32, 32>}, {transform_indices = @transform_3, window_bounds = array<i64: 1, 1, 32>}, {transform_indices = @transform_4, window_bounds = array<i64: 10>}, {transform_indices = @transform_5, window_bounds = array<i64: 1, 32, 32>}]} {
    %0 = arith.index_cast %arg0 : i32 to index
    %1 = memref.load %arg1[%0] : memref<8xi32, #tpu.memory_space<smem>>
    %c0 = arith.constant 0 : index
    %c0_0 = arith.constant 0 : index
    %2 = vector.load %arg2[%c0, %c0_0] : memref<8x32xf32, #tpu.memory_space<vmem>>, vector<8x32xf32>
    %c0_1 = arith.constant 0 : index
    %c0_2 = arith.constant 0 : index
    %3 = vector.load %arg3[%c0_1, %c0_2] : memref<8x1xi32, #tpu.memory_space<vmem>>, vector<8x1xi32>
    %4 = vector.broadcast %1 : i32 to vector<8x1xi32>
    %5 = arith.cmpi eq, %3, %4 : vector<8x1xi32>
    %cst = arith.constant 1.000000e+00 : f32
    %cst_3 = arith.constant 0.000000e+00 : f32
    %6 = vector.broadcast %cst : f32 to vector<8x1xf32>
    %7 = vector.broadcast %cst_3 : f32 to vector<8x1xf32>
    %8 = arith.select %5, %6, %7 : vector<8x1xi1>, vector<8x1xf32>
    %9 = vector.shape_cast %8 : vector<8x1xf32> to vector<1x8x1xf32>
    %cst_4 = arith.constant dense<0.000000e+00> : vector<1xf32>
    %10 = vector.multi_reduction <add>, %9, %cst_4 [1, 2] : vector<1x8x1xf32> to vector<1xf32>
    %11 = vector.shape_cast %10 : vector<1xf32> to vector<1x1x1xf32>
    %12 = vector.extract %11[0, 0, 0] : f32 from vector<1x1x1xf32>
    %cst_5 = arith.constant 1.000000e+00 : f32
    %13 = arith.maximumf %12, %cst_5 : f32
    %cst_6 = arith.constant 1.000000e+00 : f32
    %14 = arith.divf %cst_6, %13 : f32
    %15 = vector.broadcast %8 : vector<8x1xf32> to vector<8x32xf32>
    %16 = arith.mulf %2, %15 : vector<8x32xf32>
    %cst_7 = arith.constant dense<0.000000e+00> : vector<32xf32>
    %17 = vector.multi_reduction <add>, %16, %cst_7 [0] : vector<8x32xf32> to vector<32xf32>
    %18 = vector.shape_cast %17 : vector<32xf32> to vector<1x32xf32>
    %19 = vector.broadcast %14 : f32 to vector<1x32xf32>
    %20 = arith.mulf %18, %19 : vector<1x32xf32>
    %21 = vector.broadcast %20 : vector<1x32xf32> to vector<8x32xf32>
    %22 = vector.broadcast %8 : vector<8x1xf32> to vector<8x32xf32>
    %23 = arith.mulf %21, %22 : vector<8x32xf32>
    %24 = arith.subf %16, %23 : vector<8x32xf32>
    %25 = arith.index_cast %1 : i32 to index
    %26 = memref.load %arg6[%25] : memref<10xf32, #tpu.memory_space<smem>>
    %27 = arith.addf %12, %26 : f32
    %cst_8 = arith.constant 0.000000e+00 : f32
    %28 = arith.cmpf ogt, %27, %cst_8 : f32
    %29 = arith.divf %12, %27 : f32
    %cst_9 = arith.constant 0.000000e+00 : f32
    %30 = arith.select %28, %29, %cst_9 : f32
    %c0_10 = arith.constant 0 : index
    %c0_11 = arith.constant 0 : index
    %c0_12 = arith.constant 0 : index
    %31 = vector.load %arg5[%c0_10, %c0_11, %c0_12] : memref<1x1x32xf32, #tpu.memory_space<vmem>>, vector<1x1x32xf32>
    %32 = vector.shape_cast %31 : vector<1x1x32xf32> to vector<1x32xf32>
    %33 = arith.subf %32, %20 : vector<1x32xf32>
    %34 = tpu.iota {dimensions = array<i32: 0>} : vector<8x32xi32>
    %c0_i32 = arith.constant 0 : i32
    %35 = vector.broadcast %c0_i32 : i32 to vector<8x32xi32>
    %36 = arith.cmpi eq, %34, %35 : vector<8x32xi32>
    %cst_13 = arith.constant 1.000000e+00 : f32
    %37 = arith.subf %cst_13, %30 : f32
    %38 = arith.mulf %30, %37 : f32
    %39 = vector.broadcast %38 : f32 to vector<1x32xf32>
    %40 = arith.mulf %33, %39 : vector<1x32xf32>
    %cst_14 = arith.constant 0.000000e+00 : f32
    %41 = vector.shape_cast %40 : vector<1x32xf32> to vector<1x32xf32>
    %42 = vector.broadcast %41 : vector<1x32xf32> to vector<8x32xf32>
    %43 = vector.broadcast %cst_14 : f32 to vector<8x32xf32>
    %44 = arith.select %36, %42, %43 : vector<8x32xi1>, vector<8x32xf32>
    %cst_15 = arith.constant 0.000000e+00 : f32
    %45 = vector.shape_cast %33 : vector<1x32xf32> to vector<1x32xf32>
    %46 = vector.broadcast %45 : vector<1x32xf32> to vector<8x32xf32>
    %47 = vector.broadcast %cst_15 : f32 to vector<8x32xf32>
    %48 = arith.select %36, %46, %47 : vector<8x32xi1>, vector<8x32xf32>
    %49 = arith.mulf %14, %30 : f32
    %50 = vector.broadcast %49 : f32 to vector<8x32xf32>
    %51 = arith.mulf %24, %50 : vector<8x32xf32>
    %52 = tpu.concatenate %51, %44 in 0 : vector<8x32xf32>, vector<8x32xf32> -> vector<16x32xf32>
    %53 = tpu.concatenate %24, %48 in 0 : vector<8x32xf32>, vector<8x32xf32> -> vector<16x32xf32>
    %cst_16 = arith.constant dense<0.000000e+00> : vector<32x32xf32>
    %54 = tpu.matmul %52, %53, %cst_16 {dimension_numbers = #tpu.dot_dimension_numbers<[0], [0], [1], [1], [0, 1, 1, 1], [], []>} : vector<16x32xf32>, vector<16x32xf32>, vector<32x32xf32> -> vector<32x32xf32>
    %c0_17 = arith.constant 0 : index
    %c0_18 = arith.constant 0 : index
    %c0_19 = arith.constant 0 : index
    %55 = vector.load %arg4[%c0_17, %c0_18, %c0_19] : memref<1x32x32xf32, #tpu.memory_space<vmem>>, vector<1x32x32xf32>
    %56 = vector.shape_cast %55 : vector<1x32x32xf32> to vector<32x32xf32>
    %cst_20 = arith.constant 1.000000e+00 : f32
    %57 = arith.subf %cst_20, %30 : f32
    %58 = vector.broadcast %57 : f32 to vector<32x32xf32>
    %59 = arith.mulf %56, %58 : vector<32x32xf32>
    %60 = arith.addf %59, %54 : vector<32x32xf32>
    %c0_21 = arith.constant 0 : index
    %c0_22 = arith.constant 0 : index
    %c0_23 = arith.constant 0 : index
    %61 = vector.load %arg7[%c0_21, %c0_22, %c0_23] : memref<1x32x32xf32, #tpu.memory_space<vmem>>, vector<1x32x32xf32>
    %62 = vector.shape_cast %61 : vector<1x32x32xf32> to vector<32x32xf32>
    %63 = vector.shape_cast %60 : vector<32x32xf32> to vector<1x32x32xf32>
    tpu.vector_store %arg7[%c0_21, %c0_22, %c0_23], %63 {strides = array<i32>} : memref<1x32x32xf32, #tpu.memory_space<vmem>>, vector<1x32x32xf32>,
    return
  }
  func.func @transform_0(%arg0: i32, %arg1: memref<8xi32, #tpu.memory_space<smem>>) -> (i32, i32) {
    %c0_i32 = arith.constant 0 : i32
    %c0_i32_0 = arith.constant 0 : i32
    %c0_i32_1 = arith.constant 0 : i32
    return %c0_i32, %c0_i32_0 : i32, i32
  }
  func.func @transform_1(%arg0: i32, %arg1: memref<8xi32, #tpu.memory_space<smem>>) -> (i32, i32) {
    %c0_i32 = arith.constant 0 : i32
    %c0_i32_0 = arith.constant 0 : i32
    %c0_i32_1 = arith.constant 0 : i32
    return %c0_i32, %c0_i32_0 : i32, i32
  }
  func.func @transform_2(%arg0: i32, %arg1: memref<8xi32, #tpu.memory_space<smem>>) -> (i32, i32, i32) {
    %0 = arith.index_cast %arg0 : i32 to index
    %1 = memref.load %arg1[%0] : memref<8xi32, #tpu.memory_space<smem>>
    %c0_i32 = arith.constant 0 : i32
    %c0_i32_0 = arith.constant 0 : i32
    %c0_i32_1 = arith.constant 0 : i32
    return %1, %c0_i32, %c0_i32_0 : i32, i32, i32
  }
  func.func @transform_3(%arg0: i32, %arg1: memref<8xi32, #tpu.memory_space<smem>>) -> (i32, i32, i32) {
    %0 = arith.index_cast %arg0 : i32 to index
    %1 = memref.load %arg1[%0] : memref<8xi32, #tpu.memory_space<smem>>
    %c0_i32 = arith.constant 0 : i32
    %c0_i32_0 = arith.constant 0 : i32
    %c0_i32_1 = arith.constant 0 : i32
    return %1, %c0_i32, %c0_i32_0 : i32, i32, i32
  }
  func.func @transform_4(%arg0: i32, %arg1: memref<8xi32, #tpu.memory_space<smem>>) -> i32 {
    %c0_i32 = arith.constant 0 : i32
    %c0_i32_0 = arith.constant 0 : i32
    return %c0_i32 : i32
  }
  func.func @transform_5(%arg0: i32, %arg1: memref<8xi32, #tpu.memory_space<smem>>) -> (i32, i32, i32) {
    %0 = arith.index_cast %arg0 : i32 to index
    %1 = memref.load %arg1[%0] : memref<8xi32, #tpu.memory_space<smem>>
    %c0_i32 = arith.constant 0 : i32
    %c0_i32_0 = arith.constant 0 : i32
    %c0_i32_1 = arith.constant 0 : i32
    return %1, %c0_i32, %c0_i32_0 : i32, i32, i32
  }
}

module attributes {stable_mosaic.version = 11 : i64} {
  func.func @_isda_sigma_small_kernel(%arg0: i32, %arg1: memref<8xi32, #tpu.memory_space<smem>>, %arg2: memref<10x32xf32, #tpu.memory_space<vmem>>, %arg3: memref<10x32x32xf32, #tpu.memory_space<vmem>>, %arg4: memref<8x10xf32, #tpu.memory_space<vmem>>) attributes {dimension_semantics = [#tpu.dimension_semantics<arbitrary>], iteration_bounds = array<i64: 1>, scalar_prefetch = 0 : i64, scratch_operands = 0 : i64, tpu.core_type = #tpu.core_type<tc>, window_params = [{transform_indices = @transform_0, window_bounds = array<i64: 8>}, {pipeline_mode = #tpu.pipeline_mode<synchronous>, transform_indices = @transform_1, window_bounds = array<i64: 10, 32>}, {pipeline_mode = #tpu.pipeline_mode<synchronous>, transform_indices = @transform_2, window_bounds = array<i64: 10, 32, 32>}, {pipeline_mode = #tpu.pipeline_mode<synchronous>, transform_indices = @transform_3, window_bounds = array<i64: 8, 10>}]} {
    %c0 = arith.constant 0 : index
    %c0_0 = arith.constant 0 : index
    %0 = vector.load %arg2[%c0, %c0_0] : memref<10x32xf32, #tpu.memory_space<vmem>>, vector<10x32xf32>
    %c0_1 = arith.constant 0 : index
    %1 = memref.load %arg1[%c0_1] : memref<8xi32, #tpu.memory_space<smem>>
    %2 = arith.index_cast %1 : i32 to index
    %c0_2 = arith.constant 0 : index
    %3 = vector.load %arg2[%2, %c0_2] : memref<10x32xf32, #tpu.memory_space<vmem>>, vector<1x32xf32>
    %4 = vector.broadcast %3 : vector<1x32xf32> to vector<10x32xf32>
    %5 = arith.subf %0, %4 : vector<10x32xf32>
    %6 = arith.index_cast %1 : i32 to index
    %c0_3 = arith.constant 0 : index
    %c0_4 = arith.constant 0 : index
    %7 = vector.load %arg3[%6, %c0_3, %c0_4] : memref<10x32x32xf32, #tpu.memory_space<vmem>>, vector<1x32x32xf32>
    %8 = vector.shape_cast %7 : vector<1x32x32xf32> to vector<32x32xf32>
    %cst = arith.constant dense<0.000000e+00> : vector<10x32xf32>
    %9 = tpu.matmul %5, %8, %cst {dimension_numbers = #tpu.dot_dimension_numbers<[1], [0], [0], [1], [0, 0, 1, 1], [], []>} : vector<10x32xf32>, vector<32x32xf32>, vector<10x32xf32> -> vector<10x32xf32>
    %10 = arith.mulf %9, %5 : vector<10x32xf32>
    %cst_5 = arith.constant dense<0.000000e+00> : vector<10xf32>
    %11 = vector.multi_reduction <add>, %10, %cst_5 [1] : vector<10x32xf32> to vector<10xf32>
    %cst_6 = arith.constant 2.500000e-01 : f32
    %12 = vector.broadcast %cst_6 : f32 to vector<10xf32>
    %13 = arith.mulf %12, %11 : vector<10xf32>
    %14 = vector.shape_cast %13 : vector<10xf32> to vector<1x10xf32>
    %c0_7 = arith.constant 0 : index
    %c0_8 = arith.constant 0 : index
    %15 = vector.load %arg4[%c0_7, %c0_8] : memref<8x10xf32, #tpu.memory_space<vmem>>, vector<1x10xf32>
    tpu.vector_store %arg4[%c0_7, %c0_8], %14 {strides = array<i32>} : memref<8x10xf32, #tpu.memory_space<vmem>>, vector<1x10xf32>,
    %c1 = arith.constant 1 : index
    %16 = memref.load %arg1[%c1] : memref<8xi32, #tpu.memory_space<smem>>
    %17 = arith.index_cast %16 : i32 to index
    %c0_9 = arith.constant 0 : index
    %18 = vector.load %arg2[%17, %c0_9] : memref<10x32xf32, #tpu.memory_space<vmem>>, vector<1x32xf32>
    %19 = vector.broadcast %18 : vector<1x32xf32> to vector<10x32xf32>
    %20 = arith.subf %0, %19 : vector<10x32xf32>
    %21 = arith.index_cast %16 : i32 to index
    %c0_10 = arith.constant 0 : index
    %c0_11 = arith.constant 0 : index
    %22 = vector.load %arg3[%21, %c0_10, %c0_11] : memref<10x32x32xf32, #tpu.memory_space<vmem>>, vector<1x32x32xf32>
    %23 = vector.shape_cast %22 : vector<1x32x32xf32> to vector<32x32xf32>
    %cst_12 = arith.constant dense<0.000000e+00> : vector<10x32xf32>
    %24 = tpu.matmul %20, %23, %cst_12 {dimension_numbers = #tpu.dot_dimension_numbers<[1], [0], [0], [1], [0, 0, 1, 1], [], []>} : vector<10x32xf32>, vector<32x32xf32>, vector<10x32xf32> -> vector<10x32xf32>
    %25 = arith.mulf %24, %20 : vector<10x32xf32>
    %cst_13 = arith.constant dense<0.000000e+00> : vector<10xf32>
    %26 = vector.multi_reduction <add>, %25, %cst_13 [1] : vector<10x32xf32> to vector<10xf32>
    %cst_14 = arith.constant 2.500000e-01 : f32
    %27 = vector.broadcast %cst_14 : f32 to vector<10xf32>
    %28 = arith.mulf %27, %26 : vector<10xf32>
    %29 = vector.shape_cast %28 : vector<10xf32> to vector<1x10xf32>
    %c1_15 = arith.constant 1 : index
    %c0_16 = arith.constant 0 : index
    %30 = vector.load %arg4[%c1_15, %c0_16] : memref<8x10xf32, #tpu.memory_space<vmem>>, vector<1x10xf32>
    tpu.vector_store %arg4[%c1_15, %c0_16], %29 {strides = array<i32>} : memref<8x10xf32, #tpu.memory_space<vmem>>, vector<1x10xf32>,
    %c2 = arith.constant 2 : index
    %31 = memref.load %arg1[%c2] : memref<8xi32, #tpu.memory_space<smem>>
    %32 = arith.index_cast %31 : i32 to index
    %c0_17 = arith.constant 0 : index
    %33 = vector.load %arg2[%32, %c0_17] : memref<10x32xf32, #tpu.memory_space<vmem>>, vector<1x32xf32>
    %34 = vector.broadcast %33 : vector<1x32xf32> to vector<10x32xf32>
    %35 = arith.subf %0, %34 : vector<10x32xf32>
    %36 = arith.index_cast %31 : i32 to index
    %c0_18 = arith.constant 0 : index
    %c0_19 = arith.constant 0 : index
    %37 = vector.load %arg3[%36, %c0_18, %c0_19] : memref<10x32x32xf32, #tpu.memory_space<vmem>>, vector<1x32x32xf32>
    %38 = vector.shape_cast %37 : vector<1x32x32xf32> to vector<32x32xf32>
    %cst_20 = arith.constant dense<0.000000e+00> : vector<10x32xf32>
    %39 = tpu.matmul %35, %38, %cst_20 {dimension_numbers = #tpu.dot_dimension_numbers<[1], [0], [0], [1], [0, 0, 1, 1], [], []>} : vector<10x32xf32>, vector<32x32xf32>, vector<10x32xf32> -> vector<10x32xf32>
    %40 = arith.mulf %39, %35 : vector<10x32xf32>
    %cst_21 = arith.constant dense<0.000000e+00> : vector<10xf32>
    %41 = vector.multi_reduction <add>, %40, %cst_21 [1] : vector<10x32xf32> to vector<10xf32>
    %cst_22 = arith.constant 2.500000e-01 : f32
    %42 = vector.broadcast %cst_22 : f32 to vector<10xf32>
    %43 = arith.mulf %42, %41 : vector<10xf32>
    %44 = vector.shape_cast %43 : vector<10xf32> to vector<1x10xf32>
    %c2_23 = arith.constant 2 : index
    %c0_24 = arith.constant 0 : index
    %45 = vector.load %arg4[%c2_23, %c0_24] : memref<8x10xf32, #tpu.memory_space<vmem>>, vector<1x10xf32>
    tpu.vector_store %arg4[%c2_23, %c0_24], %44 {strides = array<i32>} : memref<8x10xf32, #tpu.memory_space<vmem>>, vector<1x10xf32>,
    %c3 = arith.constant 3 : index
    %46 = memref.load %arg1[%c3] : memref<8xi32, #tpu.memory_space<smem>>
    %47 = arith.index_cast %46 : i32 to index
    %c0_25 = arith.constant 0 : index
    %48 = vector.load %arg2[%47, %c0_25] : memref<10x32xf32, #tpu.memory_space<vmem>>, vector<1x32xf32>
    %49 = vector.broadcast %48 : vector<1x32xf32> to vector<10x32xf32>
    %50 = arith.subf %0, %49 : vector<10x32xf32>
    %51 = arith.index_cast %46 : i32 to index
    %c0_26 = arith.constant 0 : index
    %c0_27 = arith.constant 0 : index
    %52 = vector.load %arg3[%51, %c0_26, %c0_27] : memref<10x32x32xf32, #tpu.memory_space<vmem>>, vector<1x32x32xf32>
    %53 = vector.shape_cast %52 : vector<1x32x32xf32> to vector<32x32xf32>
    %cst_28 = arith.constant dense<0.000000e+00> : vector<10x32xf32>
    %54 = tpu.matmul %50, %53, %cst_28 {dimension_numbers = #tpu.dot_dimension_numbers<[1], [0], [0], [1], [0, 0, 1, 1], [], []>} : vector<10x32xf32>, vector<32x32xf32>, vector<10x32xf32> -> vector<10x32xf32>
    %55 = arith.mulf %54, %50 : vector<10x32xf32>
    %cst_29 = arith.constant dense<0.000000e+00> : vector<10xf32>
    %56 = vector.multi_reduction <add>, %55, %cst_29 [1] : vector<10x32xf32> to vector<10xf32>
    %cst_30 = arith.constant 2.500000e-01 : f32
    %57 = vector.broadcast %cst_30 : f32 to vector<10xf32>
    %58 = arith.mulf %57, %56 : vector<10xf32>
    %59 = vector.shape_cast %58 : vector<10xf32> to vector<1x10xf32>
    %c3_31 = arith.constant 3 : index
    %c0_32 = arith.constant 0 : index
    %60 = vector.load %arg4[%c3_31, %c0_32] : memref<8x10xf32, #tpu.memory_space<vmem>>, vector<1x10xf32>
    tpu.vector_store %arg4[%c3_31, %c0_32], %59 {strides = array<i32>} : memref<8x10xf32, #tpu.memory_space<vmem>>, vector<1x10xf32>,
    %c4 = arith.constant 4 : index
    %61 = memref.load %arg1[%c4] : memref<8xi32, #tpu.memory_space<smem>>
    %62 = arith.index_cast %61 : i32 to index
    %c0_33 = arith.constant 0 : index
    %63 = vector.load %arg2[%62, %c0_33] : memref<10x32xf32, #tpu.memory_space<vmem>>, vector<1x32xf32>
    %64 = vector.broadcast %63 : vector<1x32xf32> to vector<10x32xf32>
    %65 = arith.subf %0, %64 : vector<10x32xf32>
    %66 = arith.index_cast %61 : i32 to index
    %c0_34 = arith.constant 0 : index
    %c0_35 = arith.constant 0 : index
    %67 = vector.load %arg3[%66, %c0_34, %c0_35] : memref<10x32x32xf32, #tpu.memory_space<vmem>>, vector<1x32x32xf32>
    %68 = vector.shape_cast %67 : vector<1x32x32xf32> to vector<32x32xf32>
    %cst_36 = arith.constant dense<0.000000e+00> : vector<10x32xf32>
    %69 = tpu.matmul %65, %68, %cst_36 {dimension_numbers = #tpu.dot_dimension_numbers<[1], [0], [0], [1], [0, 0, 1, 1], [], []>} : vector<10x32xf32>, vector<32x32xf32>, vector<10x32xf32> -> vector<10x32xf32>
    %70 = arith.mulf %69, %65 : vector<10x32xf32>
    %cst_37 = arith.constant dense<0.000000e+00> : vector<10xf32>
    %71 = vector.multi_reduction <add>, %70, %cst_37 [1] : vector<10x32xf32> to vector<10xf32>
    %cst_38 = arith.constant 2.500000e-01 : f32
    %72 = vector.broadcast %cst_38 : f32 to vector<10xf32>
    %73 = arith.mulf %72, %71 : vector<10xf32>
    %74 = vector.shape_cast %73 : vector<10xf32> to vector<1x10xf32>
    %c4_39 = arith.constant 4 : index
    %c0_40 = arith.constant 0 : index
    %75 = vector.load %arg4[%c4_39, %c0_40] : memref<8x10xf32, #tpu.memory_space<vmem>>, vector<1x10xf32>
    tpu.vector_store %arg4[%c4_39, %c0_40], %74 {strides = array<i32>} : memref<8x10xf32, #tpu.memory_space<vmem>>, vector<1x10xf32>,
    %c5 = arith.constant 5 : index
    %76 = memref.load %arg1[%c5] : memref<8xi32, #tpu.memory_space<smem>>
    %77 = arith.index_cast %76 : i32 to index
    %c0_41 = arith.constant 0 : index
    %78 = vector.load %arg2[%77, %c0_41] : memref<10x32xf32, #tpu.memory_space<vmem>>, vector<1x32xf32>
    %79 = vector.broadcast %78 : vector<1x32xf32> to vector<10x32xf32>
    %80 = arith.subf %0, %79 : vector<10x32xf32>
    %81 = arith.index_cast %76 : i32 to index
    %c0_42 = arith.constant 0 : index
    %c0_43 = arith.constant 0 : index
    %82 = vector.load %arg3[%81, %c0_42, %c0_43] : memref<10x32x32xf32, #tpu.memory_space<vmem>>, vector<1x32x32xf32>
    %83 = vector.shape_cast %82 : vector<1x32x32xf32> to vector<32x32xf32>
    %cst_44 = arith.constant dense<0.000000e+00> : vector<10x32xf32>
    %84 = tpu.matmul %80, %83, %cst_44 {dimension_numbers = #tpu.dot_dimension_numbers<[1], [0], [0], [1], [0, 0, 1, 1], [], []>} : vector<10x32xf32>, vector<32x32xf32>, vector<10x32xf32> -> vector<10x32xf32>
    %85 = arith.mulf %84, %80 : vector<10x32xf32>
    %cst_45 = arith.constant dense<0.000000e+00> : vector<10xf32>
    %86 = vector.multi_reduction <add>, %85, %cst_45 [1] : vector<10x32xf32> to vector<10xf32>
    %cst_46 = arith.constant 2.500000e-01 : f32
    %87 = vector.broadcast %cst_46 : f32 to vector<10xf32>
    %88 = arith.mulf %87, %86 : vector<10xf32>
    %89 = vector.shape_cast %88 : vector<10xf32> to vector<1x10xf32>
    %c5_47 = arith.constant 5 : index
    %c0_48 = arith.constant 0 : index
    %90 = vector.load %arg4[%c5_47, %c0_48] : memref<8x10xf32, #tpu.memory_space<vmem>>, vector<1x10xf32>
    tpu.vector_store %arg4[%c5_47, %c0_48], %89 {strides = array<i32>} : memref<8x10xf32, #tpu.memory_space<vmem>>, vector<1x10xf32>,
    %c6 = arith.constant 6 : index
    %91 = memref.load %arg1[%c6] : memref<8xi32, #tpu.memory_space<smem>>
    %92 = arith.index_cast %91 : i32 to index
    %c0_49 = arith.constant 0 : index
    %93 = vector.load %arg2[%92, %c0_49] : memref<10x32xf32, #tpu.memory_space<vmem>>, vector<1x32xf32>
    %94 = vector.broadcast %93 : vector<1x32xf32> to vector<10x32xf32>
    %95 = arith.subf %0, %94 : vector<10x32xf32>
    %96 = arith.index_cast %91 : i32 to index
    %c0_50 = arith.constant 0 : index
    %c0_51 = arith.constant 0 : index
    %97 = vector.load %arg3[%96, %c0_50, %c0_51] : memref<10x32x32xf32, #tpu.memory_space<vmem>>, vector<1x32x32xf32>
    %98 = vector.shape_cast %97 : vector<1x32x32xf32> to vector<32x32xf32>
    %cst_52 = arith.constant dense<0.000000e+00> : vector<10x32xf32>
    %99 = tpu.matmul %95, %98, %cst_52 {dimension_numbers = #tpu.dot_dimension_numbers<[1], [0], [0], [1], [0, 0, 1, 1], [], []>} : vector<10x32xf32>, vector<32x32xf32>, vector<10x32xf32> -> vector<10x32xf32>
    %100 = arith.mulf %99, %95 : vector<10x32xf32>
    %cst_53 = arith.constant dense<0.000000e+00> : vector<10xf32>
    %101 = vector.multi_reduction <add>, %100, %cst_53 [1] : vector<10x32xf32> to vector<10xf32>
    %cst_54 = arith.constant 2.500000e-01 : f32
    %102 = vector.broadcast %cst_54 : f32 to vector<10xf32>
    %103 = arith.mulf %102, %101 : vector<10xf32>
    %104 = vector.shape_cast %103 : vector<10xf32> to vector<1x10xf32>
    %c6_55 = arith.constant 6 : index
    %c0_56 = arith.constant 0 : index
    %105 = vector.load %arg4[%c6_55, %c0_56] : memref<8x10xf32, #tpu.memory_space<vmem>>, vector<1x10xf32>
    tpu.vector_store %arg4[%c6_55, %c0_56], %104 {strides = array<i32>} : memref<8x10xf32, #tpu.memory_space<vmem>>, vector<1x10xf32>,
    %c7 = arith.constant 7 : index
    %106 = memref.load %arg1[%c7] : memref<8xi32, #tpu.memory_space<smem>>
    %107 = arith.index_cast %106 : i32 to index
    %c0_57 = arith.constant 0 : index
    %108 = vector.load %arg2[%107, %c0_57] : memref<10x32xf32, #tpu.memory_space<vmem>>, vector<1x32xf32>
    %109 = vector.broadcast %108 : vector<1x32xf32> to vector<10x32xf32>
    %110 = arith.subf %0, %109 : vector<10x32xf32>
    %111 = arith.index_cast %106 : i32 to index
    %c0_58 = arith.constant 0 : index
    %c0_59 = arith.constant 0 : index
    %112 = vector.load %arg3[%111, %c0_58, %c0_59] : memref<10x32x32xf32, #tpu.memory_space<vmem>>, vector<1x32x32xf32>
    %113 = vector.shape_cast %112 : vector<1x32x32xf32> to vector<32x32xf32>
    %cst_60 = arith.constant dense<0.000000e+00> : vector<10x32xf32>
    %114 = tpu.matmul %110, %113, %cst_60 {dimension_numbers = #tpu.dot_dimension_numbers<[1], [0], [0], [1], [0, 0, 1, 1], [], []>} : vector<10x32xf32>, vector<32x32xf32>, vector<10x32xf32> -> vector<10x32xf32>
    %115 = arith.mulf %114, %110 : vector<10x32xf32>
    %cst_61 = arith.constant dense<0.000000e+00> : vector<10xf32>
    %116 = vector.multi_reduction <add>, %115, %cst_61 [1] : vector<10x32xf32> to vector<10xf32>
    %cst_62 = arith.constant 2.500000e-01 : f32
    %117 = vector.broadcast %cst_62 : f32 to vector<10xf32>
    %118 = arith.mulf %117, %116 : vector<10xf32>
    %119 = vector.shape_cast %118 : vector<10xf32> to vector<1x10xf32>
    %c7_63 = arith.constant 7 : index
    %c0_64 = arith.constant 0 : index
    %120 = vector.load %arg4[%c7_63, %c0_64] : memref<8x10xf32, #tpu.memory_space<vmem>>, vector<1x10xf32>
    tpu.vector_store %arg4[%c7_63, %c0_64], %119 {strides = array<i32>} : memref<8x10xf32, #tpu.memory_space<vmem>>, vector<1x10xf32>,
    return
  }
  func.func @transform_0(%arg0: i32) -> i32 {
    %c0_i32 = arith.constant 0 : i32
    %c0_i32_0 = arith.constant 0 : i32
    return %c0_i32 : i32
  }
  func.func @transform_1(%arg0: i32) -> (i32, i32) {
    %c0_i32 = arith.constant 0 : i32
    %c0_i32_0 = arith.constant 0 : i32
    %c0_i32_1 = arith.constant 0 : i32
    return %c0_i32, %c0_i32_0 : i32, i32
  }
  func.func @transform_2(%arg0: i32) -> (i32, i32, i32) {
    %c0_i32 = arith.constant 0 : i32
    %c0_i32_0 = arith.constant 0 : i32
    %c0_i32_1 = arith.constant 0 : i32
    %c0_i32_2 = arith.constant 0 : i32
    return %c0_i32, %c0_i32_0, %c0_i32_1 : i32, i32, i32
  }
  func.func @transform_3(%arg0: i32) -> (i32, i32) {
    %c0_i32 = arith.constant 0 : i32
    %c0_i32_0 = arith.constant 0 : i32
    %c0_i32_1 = arith.constant 0 : i32
    return %c0_i32, %c0_i32_0 : i32, i32
  }
}

</mosaic_0001>

<llo_original>
// kernel: isda_forward.2
$region0: #{isda_forward.2}
  #allocation0 [shape = 'u32[]', space=smem, size = 0x4, offset = 0x4, fixed_abs, tag = 'smem constant byte address 0x4 - core index']
  #allocation1 [shape = 'u32[144,128]{1,0:T(1,128)}', space=vmem, size = 0x12000, scoped, tag = 'internal scratch']
  #allocation2 [shape = 's32[1]{0}', space=sflag, size = 0x4, scoped, tag = 'scoped memory for isda_forward.2']
  #allocation3 [shape = 'u8[512]{0}', space=smem, size = 0x200, scoped, tag = 'prefetched SMEM operand 0']
  %s0 = inlined_call_operand.vmem [shape: s32[8], index: 0, kind: input, shape index: {}]
  %s1 = inlined_call_operand.vmem [shape: f32[8,32], index: 1, kind: input, shape index: {}]
  %s2 = inlined_call_operand.vmem [shape: s32[8,1], index: 2, kind: input, shape index: {}]
  %s3 = inlined_call_operand.hbm [shape: f32[10,32,32], index: 3, kind: input, shape index: {}, may-alias: {3,6}]
  %s4 = inlined_call_operand.vmem [shape: f32[10,1,32], index: 4, kind: input, shape index: {}]
  %s5 = inlined_call_operand.vmem [shape: f32[10], index: 5, kind: input, shape index: {}]
  %s6 = inlined_call_operand.hbm [shape: f32[10,32,32], index: 6, kind: output, shape index: {}, may-alias: {3,6}]
  %s7 = sld [smem:[#allocation0]]
  $region61: #{isda_forward.2} parent=0
    _
  %s9 = ssub.s32 1, %s7
  %s10 = scalar_select 0, %s9, %s7
  %s11 = sshll.u32 %s0, 4
  %s12 = int_to_ptr.vmem [resolvable:$true] %s11
  %14 = dma.vmem_to_smem %s12, 16, [#allocation3], [#allocation2]
  %15 = dma.done [#allocation2], 16
  %16 = sfence
  $region1: #{isda_forward.2} parent=0
    #allocation4 [shape = 'u8[32768]{0}', space=vmem, size = 0x8000, scoped, tag = 'input window, operand 3']
    #allocation5 [shape = 's32[2]{0}', space=sflag, size = 0x8, scoped, tag = 'scoped memory for isda_forward.2']
    #allocation6 [shape = 's32[2]{0}', space=sflag, size = 0x8, scoped, tag = 'scoped memory for isda_forward.2']
    #allocation7 [shape = 's32[2]{0}', space=sflag, size = 0x8, scoped, tag = 'scoped memory for isda_forward.2']
    #allocation8 [shape = 'u8[512]{0}', space=smem, size = 0x200, scoped, tag = 'input window, operand 5, single buffered']
    #allocation9 [shape = 'u8[32768]{0}', space=vmem, size = 0x8000, scoped, tag = 'output window, operand 0']
    %17 = vsyncpa [#allocation5], 0
    %s18 = scalar_lea.sflag [#allocation5], 1
    %19 = vsyncpa %s18, 0
    %20 = vsyncpa [#allocation7], 0
    %21 = vsyncpa [#allocation6], 0
    %s22 = scalar_lea.sflag [#allocation6], 1
    %23 = vsyncpa %s22, 0
    loop: start=0, step=1, limit=10
    $region2: #{isda_forward.2} parent=1 // loop_pre_header
      _
    $region3: #{isda_forward.2} parent=1 // loop_header
      %s25 = sphi 0, %s29
      %p26 = scmp.ge.s32.totalorder %s25, 10
      %s33 = sphi 0, %s33
      %s35 = sphi 0, %s33
      %s36 = sphi 0, %s35
      %s50 = sphi 0, %s36
      %s54 = sphi 0, %s54
      %s56 = sphi 0, %s54
      %s57 = sphi 0, %s56
      %s71 = sphi 0, %s57
      %s79 = sphi 0, %s81
      %s82 = sphi 0, %s79
      %s83 = sphi 0, %s82
      %s99 = sphi 0, %s83
      %s107 = sphi 0, %s109
      %s110 = sphi 0, %s107
      %s111 = sphi 0, %s110
      %s127 = sphi 0, %s111
      %s131 = sphi 0, %s131
      %s133 = sphi 0, %s131
      %s134 = sphi 0, %s133
      %s148 = sphi 0, %s134
      %s156 = sphi 0, %s158
      %s159 = sphi 0, %s156
      %s160 = sphi 0, %s159
      %s176 = sphi 0, %s160
    $region4: #{isda_forward.2} parent=1 // loop_header_branch
      %28 = sbr.rel (%p26) target = $region8
    $region5: #{isda_forward.2} parent=1 // loop_body
      %s30 = ssub.s32 %s25, 1
      %s31 = ssub.s32 %s25, 2
      %s32 = sadd.s32 %s25, 1
      %s34 = sadd.s32 %s33, 1
      %p37 = scmp.eq.s32.totalorder %s25, 7
      %p38 = scmp.ne.s32.totalorder %s33, %s35
      %p39 = scmp.eq.s32.totalorder %s25, 0
      %p40 = por %p38, %p39
      %p41 = scmp.ne.s32.totalorder %s33, %s35
      %p42 = scmp.eq.s32.totalorder %s30, 7
      %p43 = por %p41, %p42
      %p44 = scmp.ne.s32.totalorder %s35, %s36
      %p45 = scmp.eq.s32.totalorder %s30, 0
      %p46 = por %p44, %p45
      %p47 = scmp.ne.s32.totalorder %s35, %s36
      %p48 = scmp.eq.s32.totalorder %s31, 7
      %p49 = por %p47, %p48
      %p51 = scmp.ne.s32.totalorder %s36, %s50
      %p52 = scmp.eq.s32.totalorder %s31, 0
      %p53 = por %p51, %p52
      %s55 = sadd.s32 %s54, 1
      %p58 = scmp.eq.s32.totalorder %s25, 7
      %p59 = scmp.ne.s32.totalorder %s54, %s56
      %p60 = scmp.eq.s32.totalorder %s25, 0
      %p61 = por %p59, %p60
      %p62 = scmp.ne.s32.totalorder %s54, %s56
      %p63 = scmp.eq.s32.totalorder %s30, 7
      %p64 = por %p62, %p63
      %p65 = scmp.ne.s32.totalorder %s56, %s57
      %p66 = scmp.eq.s32.totalorder %s30, 0
      %p67 = por %p65, %p66
      %p68 = scmp.ne.s32.totalorder %s56, %s57
      %p69 = scmp.eq.s32.totalorder %s31, 7
      %p70 = por %p68, %p69
      %p72 = scmp.ne.s32.totalorder %s57, %s71
      %p73 = scmp.eq.s32.totalorder %s31, 0
      %p74 = por %p72, %p73
      %s75 = sld [smem:[#allocation3 + %s25]]
      %s76 = sld [smem:[#allocation3 + %s32]]
      %s77 = ssub.s32 %s75, %s76
      %p78 = scmp.eq.s32.totalorder %s77, 0
      %s80 = sadd.s32 %s79, 1
      %s81 = scalar_select %p78, %s79, %s80
      %p84 = pneg %p78
      %p85 = scmp.eq.s32.totalorder %s25, 7
      %p86 = por %p84, %p85
      %p87 = scmp.ne.s32.totalorder %s79, %s82
      %p88 = scmp.eq.s32.totalorder %s25, 0
      %p89 = por %p87, %p88
      %p90 = scmp.ne.s32.totalorder %s79, %s82
      %p91 = scmp.eq.s32.totalorder %s30, 7
      %p92 = por %p90, %p91
      %p93 = scmp.ne.s32.totalorder %s82, %s83
      %p94 = scmp.eq.s32.totalorder %s30, 0
      %p95 = por %p93, %p94
      %p96 = scmp.ne.s32.totalorder %s82, %s83
      %p97 = scmp.eq.s32.totalorder %s31, 7
      %p98 = por %p96, %p97
      %p100 = scmp.ne.s32.totalorder %s83, %s99
      %p101 = scmp.eq.s32.totalorder %s31, 0
      %p102 = por %p100, %p101
      %s103 = sld [smem:[#allocation3 + %s25]]
      %s104 = sld [smem:[#allocation3 + %s32]]
      %s105 = ssub.s32 %s103, %s104
      %p106 = scmp.eq.s32.totalorder %s105, 0
      %s108 = sadd.s32 %s107, 1
      %s109 = scalar_select %p106, %s107, %s108
      %p112 = pneg %p106
      %p113 = scmp.eq.s32.totalorder %s25, 7
      %p114 = por %p112, %p113
      %p115 = scmp.ne.s32.totalorder %s107, %s110
      %p116 = scmp.eq.s32.totalorder %s25, 0
      %p117 = por %p115, %p116
      %p118 = scmp.ne.s32.totalorder %s107, %s110
      %p119 = scmp.eq.s32.totalorder %s30, 7
      %p120 = por %p118, %p119
      %p121 = scmp.ne.s32.totalorder %s110, %s111
      %p122 = scmp.eq.s32.totalorder %s30, 0
      %p123 = por %p121, %p122
      %p124 = scmp.ne.s32.totalorder %s110, %s111
      %p125 = scmp.eq.s32.totalorder %s31, 7
      %p126 = por %p124, %p125
      %p128 = scmp.ne.s32.totalorder %s111, %s127
      %p129 = scmp.eq.s32.totalorder %s31, 0
      %p130 = por %p128, %p129
      %s132 = sadd.s32 %s131, 1
      %p135 = scmp.eq.s32.totalorder %s25, 7
      %p136 = scmp.ne.s32.totalorder %s131, %s133
      %p137 = scmp.eq.s32.totalorder %s25, 0
      %p138 = por %p136, %p137
      %p139 = scmp.ne.s32.totalorder %s131, %s133
      %p140 = scmp.eq.s32.totalorder %s30, 7
      %p141 = por %p139, %p140
      %p142 = scmp.ne.s32.totalorder %s133, %s134
      %p143 = scmp.eq.s32.totalorder %s30, 0
      %p144 = por %p142, %p143
      %p145 = scmp.ne.s32.totalorder %s133, %s134
      %p146 = scmp.eq.s32.totalorder %s31, 7
      %p147 = por %p145, %p146
      %p149 = scmp.ne.s32.totalorder %s134, %s148
      %p150 = scmp.eq.s32.totalorder %s31, 0
      %p151 = por %p149, %p150
      %s152 = sld [smem:[#allocation3 + %s25]]
      %s153 = sld [smem:[#allocation3 + %s32]]
      %s154 = ssub.s32 %s152, %s153
      %p155 = scmp.eq.s32.totalorder %s154, 0
      %s157 = sadd.s32 %s156, 1
      %s158 = scalar_select %p155, %s156, %s157
      %p161 = pneg %p155
      %p162 = scmp.eq.s32.totalorder %s25, 7
      %p163 = por %p161, %p162
      %p164 = scmp.ne.s32.totalorder %s156, %s159
      %p165 = scmp.eq.s32.totalorder %s25, 0
      %p166 = por %p164, %p165
      %p167 = scmp.ne.s32.totalorder %s156, %s159
      %p168 = scmp.eq.s32.totalorder %s30, 7
      %p169 = por %p167, %p168
      %p170 = scmp.ne.s32.totalorder %s159, %s160
      %p171 = scmp.eq.s32.totalorder %s30, 0
      %p172 = por %p170, %p171
      %p173 = scmp.ne.s32.totalorder %s159, %s160
      %p174 = scmp.eq.s32.totalorder %s31, 7
      %p175 = por %p173, %p174
      %p177 = scmp.ne.s32.totalorder %s160, %s176
      %p178 = scmp.eq.s32.totalorder %s31, 0
      %p179 = por %p177, %p178
      %p180 = scmp.le.s32.totalorder 1, %s25
      %p181 = scmp.lt.s32.totalorder %s25, 9
      %p182 = pnand %p180, %p181
      %p183 = pneg %p182
      // Predicated region
      $region9: #{isda_forward.2} parent=5 // pred_check
        _
      $region10: #{isda_forward.2} parent=5 // pred_check_branch
        %185 = sbr.rel (%p182) target = $region12
      $region11: #{isda_forward.2} parent=5 // pred_region
        %s186 = ssub.s32 %s25, 1
        // Predicated region
        $region13: #{isda_forward.2} parent=11 // pred_check
          %p187 = pneg %p46
        $region14: #{isda_forward.2} parent=11 // pred_check_branch
          %189 = sbr.rel (%p187) target = $region16
        $region15: #{isda_forward.2} parent=11 // pred_region
          _
        $region16: #{isda_forward.2} parent=11 // pred_fallthru
          _
        // Predicated region
        $region17: #{isda_forward.2} parent=11 // pred_check
          %p190 = pneg %p67
        $region18: #{isda_forward.2} parent=11 // pred_check_branch
          %192 = sbr.rel (%p190) target = $region20
        $region19: #{isda_forward.2} parent=11 // pred_region
          _
        $region20: #{isda_forward.2} parent=11 // pred_fallthru
          _
        // Predicated region
        $region21: #{isda_forward.2} parent=11 // pred_check
          %p193 = pneg %p144
        $region22: #{isda_forward.2} parent=11 // pred_check_branch
          %195 = sbr.rel (%p193) target = $region24
        $region23: #{isda_forward.2} parent=11 // pred_region
          %s197 = ssub.s32 16, 16
          %198 = vsyncadd [#allocation7], %s197
          %s200 = sshll.u32 %s5, 4
          %s201 = int_to_ptr.vmem [resolvable:$true] %s200
          %203 = dma.vmem_to_smem %s201, 16, [#allocation8], [#allocation7]
        $region24: #{isda_forward.2} parent=11 // pred_fallthru
          _
      $region12: #{isda_forward.2} parent=5 // pred_fallthru
        _
      %p204 = scmp.lt.s32.totalorder %s25, 8
      // Predicated region
      $region25: #{isda_forward.2} parent=5 // pred_check
        %p205 = pneg %p204
      $region26: #{isda_forward.2} parent=5 // pred_check_branch
        %207 = sbr.rel (%p205) target = $region28
      $region27: #{isda_forward.2} parent=5 // pred_region
        // Predicated region
        $region29: #{isda_forward.2} parent=27 // pred_check
          %p208 = pneg %p89
        $region30: #{isda_forward.2} parent=27 // pred_check_branch
          %210 = sbr.rel (%p208) target = $region32
        $region31: #{isda_forward.2} parent=27 // pred_region
          %s211 = sand.u32 %s79, 1
          %s212 = scalar_lea.sflag [#allocation5], %s211
          %s213 = sand.u32 %s79, 1
          %s214 = smul.addr %s213, 32
          %s215 = scalar_lea.vmem [#allocation4], %s214
          %s216 = sld [smem:[#allocation3 + %s25]]
          %s218 = ssub.s32 512, 512
          %219 = vsyncadd %s212, %s218
          %s220 = smul.addr %s216, 4
          %s221 = smul.addr %s220, 128
          %s222 = scalar_lea.hbm %s3, %s221
          %s223 = sshll.u32 %s215, 4
          %s224 = int_to_ptr.vmem [resolvable:$true] %s223
          %229 = dma.hbm_to_vmem [thread:$0]  %s222, 512, %s224, %s212, 128, 128, 8
        $region32: #{isda_forward.2} parent=27 // pred_fallthru
          _
        // Predicated region
        $region33: #{isda_forward.2} parent=27 // pred_check
          %p230 = pneg %p117
        $region34: #{isda_forward.2} parent=27 // pred_check_branch
          %232 = sbr.rel (%p230) target = $region36
        $region35: #{isda_forward.2} parent=27 // pred_region
          %s233 = sld [smem:[#allocation3 + %s25]]
          %p234 = scmp.lt.s32.totalorder %s233, 9
          %s235 = scalar_select %p234, %s233, 9
          %s236 = scalar_lea.vmem %s4, %s235
          %s237 = sld [smem:[#allocation3 + %s25]]
        $region36: #{isda_forward.2} parent=27 // pred_fallthru
          _
      $region28: #{isda_forward.2} parent=5 // pred_fallthru
        _
      %p238 = scmp.le.s32.totalorder 1, %s25
      %p239 = scmp.lt.s32.totalorder %s25, 9
      %p240 = pnand %p238, %p239
      %p241 = pneg %p240
      // Predicated region
      $region37: #{isda_forward.2} parent=5 // pred_check
        _
      $region38: #{isda_forward.2} parent=5 // pred_check_branch
        %243 = sbr.rel (%p240) target = $region40
      $region39: #{isda_forward.2} parent=5 // pred_region
        %s244 = ssub.s32 %s25, 1
        %s245 = sand.u32 %s82, 1
        %s246 = scalar_lea.sflag [#allocation5], %s245
        %s247 = sand.u32 %s82, 1
        %s248 = smul.addr %s247, 32
        %s249 = scalar_lea.vmem [#allocation4], %s248
        // Predicated region
        $region41: #{isda_forward.2} parent=39 // pred_check
          %p250 = pneg %p95
        $region42: #{isda_forward.2} parent=39 // pred_check_branch
          %252 = sbr.rel (%p250) target = $region44
        $region43: #{isda_forward.2} parent=39 // pred_region
          %253 = dma.done %s246, 512
        $region44: #{isda_forward.2} parent=39 // pred_fallthru
          _
        // Predicated region
        $region45: #{isda_forward.2} parent=39 // pred_check
          %p254 = pneg %p144
        $region46: #{isda_forward.2} parent=39 // pred_check_branch
          %256 = sbr.rel (%p254) target = $region48
        $region47: #{isda_forward.2} parent=39 // pred_region
          %257 = dma.done [#allocation7], 16
        $region48: #{isda_forward.2} parent=39 // pred_fallthru
          _
        %258 = sfence
        %p259 = pneg %p46
        %p260 = pneg %p43
        %p261 = pneg %p67
        %p262 = pneg %p64
        %s263 = sand.u32 %s82, 1
        %s264 = scalar_lea.sflag [#allocation5], %s263
        %s265 = sand.u32 %s82, 1
        %s266 = smul.addr %s265, 32
        %s267 = scalar_lea.vmem [#allocation4], %s266
        %p268 = pneg %p95
        %p269 = pneg %p92
        %s270 = sld [smem:[#allocation3 + %s30]]
        %p271 = scmp.lt.s32.totalorder %s270, 9
        %s272 = scalar_select %p271, %s270, 9
        %s273 = scalar_lea.vmem %s4, %s272
        %p274 = pneg %p123
        %p275 = pneg %p120
        %p276 = pneg %p144
        %p277 = pneg %p141
        %p278 = pneg %p172
        %p279 = pneg %p169
        %s280 = sand.u32 %s159, 1
        %s281 = scalar_lea.sflag [#allocation6], %s280
        %s282 = sand.u32 %s159, 1
        %s283 = smul.addr %s282, 32
        %s284 = scalar_lea.vmem [#allocation9], %s283
        %s285 = sld [smem:[#allocation3 + %s30]]
        %s286 = sld [smem:[#allocation3 + %s30]]
        %p287 = scmp.lt.s32.totalorder %s286, 9
        %s288 = scalar_select %p287, %s286, 9
        %s289 = scalar_lea.vmem %s4, %s288
        %s290 = sld [smem:[#allocation3 + %s30]]
        %s291 = sld [smem:[#allocation3 + %s30]]
        %s292 = sld [smem:[#allocation3 + %s30]]
        %v293 = vld [vmem:[%s1] sm:$0xff]
        %v294 = vld [vmem:[%s2] sm:$0xff]
        %v295 = vstv %s292
        %vm296 = vcmp.eq.s32.totalorder %v294, %v295
        %v297 = vsel %vm296, 1.0, 0.0
        %vm298 = vcmask 7168
        %v299 = vsel %vm298, %v297, 0.0
        %300 = vadd.xlane.f32.xlu0 %v299
        %v301 = vpop.xlane.xlu0 %300
        %v302 = vrot.slane %v301, 4
        %v303 = vadd.f32 %v301, %v302
        %v304 = vrot.slane %v303, 2
        %v305 = vadd.f32 %v303, %v304
        %v306 = vrot.slane %v305, 1
        %v307 = vadd.f32 %v305, %v306
        %s308 = vtos %v307
        %s309 = smax.f32 %s308, 1.0
        %v310 = vstv %s309
        %v311 = vrcp.pop %v310
        %s312 = vtos %v311
        %314 = vset.pattern.permute.xlu0 0
        %315 = vperm.xlu0 %314, %v297
        %v316 = vpop.permute.xlu0 %315
        %v318 = vmul.f32 %v293, %v316
        %vm319 = vcmask 261120
        %v320 = vsel %vm319, %v318, 0.0
        %v321 = vrot.slane %v320, 4
        %v322 = vadd.f32 %v320, %v321
        %v323 = vrot.slane %v322, 2
        %v324 = vadd.f32 %v322, %v323
        %v325 = vrot.slane %v324, 1
        %v326 = vadd.f32 %v324, %v325
        %v327 = vstv %s312
        %v328 = vmul.f32 %v326, %v327
        %v329 = vmul.f32 %v328, %v316
        %v330 = vsub.f32 %v318, %v329
        %s331 = sld [smem:[#allocation8 + %s292]]
        %s332 = sadd.f32 %s308, %s331
        %p333 = scmp.gt.f32.partialorder %s332, 0.0
        %v334 = vstv %s332
        %v335 = vrcp.pop %v334
        %s336 = vtos %v335
        %s337 = smul.f32 %s308, %s336
        %s338 = scalar_select %p333, %s337, 0.0
        %v339 = vld [vmem:[%s289] sm:$0x1]
        %v340 = vsub.f32 %v339, %v328
        %v341 = vlaneseq
        %v342 = vshrl.u32 %v341, 7
        %vm343 = vcmp.eq.s32.totalorder %v342, 0
        %s344 = ssub.f32 1.0, %s338
        %s345 = smul.f32 %s338, %s344
        %v346 = vstv %s345
        %v347 = vmul.f32 %v340, %v346
        %v349 = vlaneseq
        %v350 = vshrl.u32 %v349, 7
        %v351 = vsub.s32 0, %v350
        %v352 = vrot.slane %v347, %v351
        %v354 = vsel %vm343, %v352, 0.0
        %v356 = vlaneseq
        %v357 = vshrl.u32 %v356, 7
        %v358 = vsub.s32 0, %v357
        %v359 = vrot.slane %v340, %v358
        %v361 = vsel %vm343, %v359, 0.0
        %s362 = smul.f32 %s312, %s338
        %v363 = vstv %s362
        %v364 = vmul.f32 %v330, %v363
        %365 = vxpose.xlu0.b32.start [1/16] %v364, 128
        %366 = vxpose.xlu0.b32.cont [2/16] %v354, 128
        %367 = vxpose.xlu0.b32.cont [3/16] 0.0, 128
        %368 = vxpose.xlu0.b32.cont [4/16] 0.0, 128
        %369 = vxpose.xlu0.b32.cont [5/16] 0.0, 128
        %370 = vxpose.xlu0.b32.cont [6/16] 0.0, 128
        %371 = vxpose.xlu0.b32.cont [7/16] 0.0, 128
        %372 = vxpose.xlu0.b32.cont [8/16] 0.0, 128
        %373 = vxpose.xlu0.b32.cont [9/16] 0.0, 128
        %374 = vxpose.xlu0.b32.cont [10/16] 0.0, 128
        %375 = vxpose.xlu0.b32.cont [11/16] 0.0, 128
        %376 = vxpose.xlu0.b32.cont [12/16] 0.0, 128
        %377 = vxpose.xlu0.b32.cont [13/16] 0.0, 128
        %378 = vxpose.xlu0.b32.cont [14/16] 0.0, 128
        %379 = vxpose.xlu0.b32.cont [15/16] 0.0, 128
        %380 = vxpose.xlu0.b32.end [16/16] 0.0, 128
        %v381 = vpop.trf.xlu0
        %v382 = vpop.trf.xlu0
        %v383 = vpop.trf.xlu0
        %v384 = vpop.trf.xlu0
        %v385 = vpop.trf.xlu0
        %v386 = vpop.trf.xlu0
        %v387 = vpop.trf.xlu0
        %v388 = vpop.trf.xlu0
        %v389 = vpop.trf.xlu0
        %v390 = vpop.trf.xlu0
        %v391 = vpop.trf.xlu0
        %v392 = vpop.trf.xlu0
        %v393 = vpop.trf.xlu0
        %v394 = vpop.trf.xlu0
        %v395 = vpop.trf.xlu0
        %v396 = vpop.trf.xlu0
        %vm397 = vcmask 130048
        %v399 = vsel %vm397, %v381, 0
        %v402 = vsel %vm397, %v382, 0
        %v405 = vsel %vm397, %v383, 0
        %v408 = vsel %vm397, %v384, 0
        %410 = vmatprep.subr.mxu0 0.0
        %411 = vmatpush1.msra.mxu0 %v330
        %412 = vmatprep.subr.mxu0 0.0
        %413 = vmatpush1.msra.mxu0 %v361
        %414 = vmatprep.subr.mxu0 0.0
        %415 = vmatpush1.msra.mxu0 0.0
        %416 = vmatprep.subr.mxu0 0.0
        %417 = vmatpush1.msra.mxu0 0.0
        %418 = vmatprep.subr.mxu0 0.0
        %419 = vmatpush1.msra.mxu0 0.0
        %420 = vmatprep.subr.mxu0 0.0
        %421 = vmatpush1.msra.mxu0 0.0
        %422 = vmatprep.subr.mxu0 0.0
        %423 = vmatpush1.msra.mxu0 0.0
        %424 = vmatprep.subr.mxu0 0.0
        %425 = vmatpush1.msra.mxu0 0.0
        %426 = vmatprep.subr.mxu0 0.0
        %427 = vmatpush1.msra.mxu0 0.0
        %428 = vmatprep.subr.mxu0 0.0
        %429 = vmatpush1.msra.mxu0 0.0
        %430 = vmatprep.subr.mxu0 0.0
        %431 = vmatpush1.msra.mxu0 0.0
        %432 = vmatprep.subr.mxu0 0.0
        %433 = vmatpush1.msra.mxu0 0.0
        %434 = vmatprep.subr.mxu0 0.0
        %435 = vmatpush1.msra.mxu0 0.0
        %436 = vmatprep.subr.mxu0 0.0
        %437 = vmatpush1.msra.mxu0 0.0
        %438 = vmatprep.subr.mxu0 0.0
        %439 = vmatpush1.msra.mxu0 0.0
        %440 = vmatprep.subr.mxu0 0.0
        %441 = vmatpush1.msra.mxu0 0.0
        %442 = vmatprep.subr.mxu0 0.0
        %443 = vmatpush1.msra.mxu0 0.0
        %444 = vmatprep.subr.mxu0 0.0
        %445 = vmatpush1.msra.mxu0 0.0
        %446 = vmatprep.subr.mxu0 0.0
        %447 = vmatpush1.msra.mxu0 0.0
        %448 = vmatprep.subr.mxu0 0.0
        %449 = vmatpush1.msra.mxu0 0.0
        %450 = vmatprep.subr.mxu0 0.0
        %451 = vmatpush1.msra.mxu0 0.0
        %452 = vmatprep.subr.mxu0 0.0
        %453 = vmatpush1.msra.mxu0 0.0
        %454 = vmatprep.subr.mxu0 0.0
        %455 = vmatpush1.msra.mxu0 0.0
        %456 = vmatprep.subr.mxu0 0.0
        %457 = vmatpush1.msra.mxu0 0.0
        %458 = vmatprep.subr.mxu0 0.0
        %459 = vmatpush1.msra.mxu0 0.0
        %460 = vmatprep.subr.mxu0 0.0
        %461 = vmatpush1.msra.mxu0 0.0
        %462 = vmatprep.subr.mxu0 0.0
        %463 = vmatpush1.msra.mxu0 0.0
        %464 = vmatprep.subr.mxu0 0.0
        %465 = vmatpush1.msra.mxu0 0.0
        %466 = vmatprep.subr.mxu0 0.0
        %467 = vmatpush1.msra.mxu0 0.0
        %468 = vmatprep.subr.mxu0 0.0
        %469 = vmatpush1.msra.mxu0 0.0
        %470 = vmatprep.subr.mxu0 0.0
        %471 = vmatpush1.msra.mxu0 0.0
        %472 = vmatprep.subr.mxu0 0.0
        %473 = vmatpush1.msra.mxu0 0.0
        %474 = vmatprep.mubr.f32.mxu0 0.0
        %475 = vmatmul.mubr.f32.gmra.mrb[0].mxu0 %v399
        %v476 = vpop.f32.mrb[0].mxu0
        %v477 = vadd.f32 0.0, %v476
        %v478 = vpop.f32.mrb[0].mxu0
        %479 = vmatprep.mubr.f32.mxu0 0.0
        %480 = vmatmul.mubr.f32.gmra.mrb[0].mxu0 %v402
        %v481 = vpop.f32.mrb[0].mxu0
        %v482 = vadd.f32 0.0, %v481
        %v483 = vpop.f32.mrb[0].mxu0
        %484 = vmatprep.mubr.f32.mxu0 0.0
        %485 = vmatmul.mubr.f32.gmra.mrb[0].mxu0 %v405
        %v486 = vpop.f32.mrb[0].mxu0
        %v487 = vadd.f32 0.0, %v486
        %v488 = vpop.f32.mrb[0].mxu0
        %489 = vmatprep.mubr.f32.mxu0 0.0
        %490 = vmatmul.mubr.f32.gmra.mrb[0].mxu0 %v408
        %v491 = vpop.f32.mrb[0].mxu0
        %v492 = vadd.f32 0.0, %v491
        %v493 = vpop.f32.mrb[0].mxu0
        %494 = vdwg.mxu0
        %v495 = vld [vmem:[%s249] sm:$0xff]
        %v496 = vld [vmem:[%s249 + $0x8] sm:$0xff]
        %v497 = vld [vmem:[%s249 + $0x10] sm:$0xff]
        %v498 = vld [vmem:[%s249 + $0x18] sm:$0xff]
        %v499 = vstv %s344
        %v500 = vmul.f32 %v495, %v499
        %v501 = vmul.f32 %v496, %v499
        %v502 = vmul.f32 %v497, %v499
        %v503 = vmul.f32 %v498, %v499
        %v504 = vadd.f32 %v500, %v477
        %v505 = vadd.f32 %v501, %v482
        %v506 = vadd.f32 %v502, %v487
        %v507 = vadd.f32 %v503, %v492
        %508 = vst.msk [vmem:[%s284] sm:$0xff] %vm319, %v504
        %509 = vst.msk [vmem:[%s284 + $0x8] sm:$0xff] %vm319, %v505
        %510 = vst.msk [vmem:[%s284 + $0x10] sm:$0xff] %vm319, %v506
        %511 = vst.msk [vmem:[%s284 + $0x18] sm:$0xff] %vm319, %v507
        %s512 = sand.u32 %s159, 1
        %s513 = scalar_lea.sflag [#allocation6], %s512
        %s514 = sand.u32 %s159, 1
        %s515 = smul.addr %s514, 32
        %s516 = scalar_lea.vmem [#allocation9], %s515
        // Predicated region
        $region49: #{isda_forward.2} parent=39 // pred_check
          %p517 = pneg %p169
        $region50: #{isda_forward.2} parent=39 // pred_check_branch
          %519 = sbr.rel (%p517) target = $region52
        $region51: #{isda_forward.2} parent=39 // pred_region
          %s520 = sld [smem:[#allocation3 + %s30]]
          %s522 = ssub.s32 512, 512
          %523 = vsyncadd %s513, %s522
          %s524 = smul.addr %s520, 4
          %s525 = smul.addr %s524, 128
          %s526 = scalar_lea.hbm %s6, %s525
          %s527 = sshll.u32 %s516, 4
          %s528 = int_to_ptr.vmem [resolvable:$true] %s527
          %533 = dma.vmem_to_hbm [thread:$0]  %s528, 512, %s526, %s513, 128, 128, 8
        $region52: #{isda_forward.2} parent=39 // pred_fallthru
          _
      $region40: #{isda_forward.2} parent=5 // pred_fallthru
        _
      %p534 = scmp.le.s32.totalorder 2, %s25
      // Predicated region
      $region53: #{isda_forward.2} parent=5 // pred_check
        %p535 = pneg %p534
      $region54: #{isda_forward.2} parent=5 // pred_check_branch
        %537 = sbr.rel (%p535) target = $region56
      $region55: #{isda_forward.2} parent=5 // pred_region
        %s538 = ssub.s32 %s25, 2
        // Predicated region
        $region57: #{isda_forward.2} parent=55 // pred_check
          %p539 = pneg %p175
        $region58: #{isda_forward.2} parent=55 // pred_check_branch
          %541 = sbr.rel (%p539) target = $region60
        $region59: #{isda_forward.2} parent=55 // pred_region
          %s542 = sand.u32 %s160, 1
          %s543 = scalar_lea.sflag [#allocation6], %s542
          %s544 = sand.u32 %s160, 1
          %s545 = smul.addr %s544, 32
          %s546 = scalar_lea.vmem [#allocation9], %s545
          %547 = dma.done %s543, 512
        $region60: #{isda_forward.2} parent=55 // pred_fallthru
          _
      $region56: #{isda_forward.2} parent=5 // pred_fallthru
        _
    $region6: #{isda_forward.2} parent=1 // loop_footer
      %s29 = sadd.s32 1, %s25
    $region7: #{isda_forward.2} parent=1 // loop_footer_branch
      %24 = sbr.rel target = $region3
    $region8: #{isda_forward.2} parent=1 // loop_exit
      _
    %548 = vsyncpa [#allocation5], 1
    %s549 = scalar_lea.sflag [#allocation5], 1
    %550 = vsyncpa %s549, 1
    %551 = vsyncpa [#allocation6], 1
    %s552 = scalar_lea.sflag [#allocation6], 1
    %553 = vsyncpa %s552, 1
    %554 = vsyncpa [#allocation7], 1
    %s555 = scalar_lea.sflag [#allocation7], 1
    %556 = vsyncpa %s555, 1

// kernel: isda_forward.3
$region0: #{isda_forward.3}
  #allocation0 [shape = 'u32[]', space=smem, size = 0x4, offset = 0x4, fixed_abs, tag = 'smem constant byte address 0x4 - core index']
  #allocation1 [shape = 'u32[144,128]{1,0:T(1,128)}', space=vmem, size = 0x12000, scoped, tag = 'internal scratch']
  %s0 = inlined_call_operand.vmem [shape: s32[8], index: 0, kind: input, shape index: {}]
  %s1 = inlined_call_operand.vmem [shape: f32[10,32], index: 1, kind: input, shape index: {}]
  %s2 = inlined_call_operand.hbm [shape: f32[10,32,32], index: 2, kind: input, shape index: {}]
  %s3 = inlined_call_operand.vmem [shape: f32[8,10], index: 3, kind: output, shape index: {}]
  %s4 = sld [smem:[#allocation0]]
  $region30: #{isda_forward.3} parent=0
    _
  %s6 = ssub.s32 1, %s4
  %s7 = scalar_select 0, %s6, %s4
  $region1: #{isda_forward.3} parent=0
    #allocation2 [shape = 'u8[512]{0}', space=smem, size = 0x200, scoped, tag = 'input window, operand 0, single buffered']
    #allocation3 [shape = 's32[1]{0}', space=sflag, size = 0x4, scoped, tag = 'scoped memory for isda_forward.3']
    #allocation4 [shape = 's32[1]{0}', space=sflag, size = 0x4, scoped, tag = 'scoped memory for isda_forward.3']
    #allocation5 [shape = 'u8[163840]{0}', space=vmem, size = 0x28000, scoped, tag = 'input window, operand 2, single buffered']
    %8 = vsyncpa [#allocation4], 0
    %9 = vsyncpa [#allocation3], 0
    // Predicated region
    $region2: #{isda_forward.3} parent=1 // pred_check
      _
    $region3: #{isda_forward.3} parent=1 // pred_check_branch
      %11 = sbr.rel (0) target = $region5
    $region4: #{isda_forward.3} parent=1 // pred_region
      %s13 = ssub.s32 16, 16
      %14 = vsyncadd [#allocation4], %s13
      %s16 = sshll.u32 %s0, 4
      %s17 = int_to_ptr.vmem [resolvable:$true] %s16
      %19 = dma.vmem_to_smem %s17, 16, [#allocation2], [#allocation4]
    $region5: #{isda_forward.3} parent=1 // pred_fallthru
      _
    // Predicated region
    $region6: #{isda_forward.3} parent=1 // pred_check
      _
    $region7: #{isda_forward.3} parent=1 // pred_check_branch
      %21 = sbr.rel (0) target = $region9
    $region8: #{isda_forward.3} parent=1 // pred_region
      _
    $region9: #{isda_forward.3} parent=1 // pred_fallthru
      _
    // Predicated region
    $region10: #{isda_forward.3} parent=1 // pred_check
      _
    $region11: #{isda_forward.3} parent=1 // pred_check_branch
      %23 = sbr.rel (0) target = $region13
    $region12: #{isda_forward.3} parent=1 // pred_region
      %s25 = ssub.s32 5120, 5120
      %26 = vsyncadd [#allocation3], %s25
      %s27 = sshll.u32 [#allocation5], 4
      %s28 = int_to_ptr.vmem [resolvable:$true] %s27
      %33 = dma.hbm_to_vmem [thread:$0]  %s2, 5120, %s28, [#allocation3], 128, 128, 8
    $region13: #{isda_forward.3} parent=1 // pred_fallthru
      _
    // Predicated region
    $region14: #{isda_forward.3} parent=1 // pred_check
      _
    $region15: #{isda_forward.3} parent=1 // pred_check_branch
      %35 = sbr.rel (0) target = $region17
    $region16: #{isda_forward.3} parent=1 // pred_region
      %36 = dma.done [#allocation4], 16
    $region17: #{isda_forward.3} parent=1 // pred_fallthru
      _
    // Predicated region
    $region18: #{isda_forward.3} parent=1 // pred_check
      _
    $region19: #{isda_forward.3} parent=1 // pred_check_branch
      %38 = sbr.rel (0) target = $region21
    $region20: #{isda_forward.3} parent=1 // pred_region
      %39 = dma.done [#allocation3], 5120
    $region21: #{isda_forward.3} parent=1 // pred_fallthru
      _
    %40 = sfence
    %v41 = vld [vmem:[%s1] sm:$0xff]
    %v42 = vld [vmem:[%s1 + $0x8] sm:$0x3]
    %s43 = sld [smem:[#allocation2]]
    %s44 = scalar_lea.vmem %s1, %s43
    %v45 = vld [vmem:[%s44] sm:$0x1]
    %v46 = vlaneseq
    %v47 = vshrl.u32 %v46, 7
    %v48 = vsub.s32 0, %v47
    %v49 = vrot.slane %v45, %v48
    %v50 = vsub.f32 %v41, %v49
    %v51 = vsub.f32 %v42, %v49
    %s52 = smul.u32 %s43, 32
    %s53 = scalar_lea.vmem [#allocation5], %s52
    %v54 = vld [vmem:[%s53] sm:$0xff]
    %v55 = vld [vmem:[%s53 + $0x8] sm:$0xff]
    %v56 = vld [vmem:[%s53 + $0x10] sm:$0xff]
    %v57 = vld [vmem:[%s53 + $0x18] sm:$0xff]
    %vm58 = vcmask 261120
    %v60 = vsel %vm58, %v50, 0
    %v63 = vsel %vm58, %v51, 0
    %65 = vmatprep.subr.mxu0 0.0
    %66 = vmatpush1.msra.mxu0 %v54
    %67 = vmatprep.subr.mxu0 0.0
    %68 = vmatpush1.msra.mxu0 %v55
    %69 = vmatprep.subr.mxu0 0.0
    %70 = vmatpush1.msra.mxu0 %v56
    %71 = vmatprep.subr.mxu0 0.0
    %72 = vmatpush1.msra.mxu0 %v57
    %73 = vmatprep.subr.mxu0 0.0
    %74 = vmatpush1.msra.mxu0 0.0
    %75 = vmatprep.subr.mxu0 0.0
    %76 = vmatpush1.msra.mxu0 0.0
    %77 = vmatprep.subr.mxu0 0.0
    %78 = vmatpush1.msra.mxu0 0.0
    %79 = vmatprep.subr.mxu0 0.0
    %80 = vmatpush1.msra.mxu0 0.0
    %81 = vmatprep.subr.mxu0 0.0
    %82 = vmatpush1.msra.mxu0 0.0
    %83 = vmatprep.subr.mxu0 0.0
    %84 = vmatpush1.msra.mxu0 0.0
    %85 = vmatprep.subr.mxu0 0.0
    %86 = vmatpush1.msra.mxu0 0.0
    %87 = vmatprep.subr.mxu0 0.0
    %88 = vmatpush1.msra.mxu0 0.0
    %89 = vmatprep.subr.mxu0 0.0
    %90 = vmatpush1.msra.mxu0 0.0
    %91 = vmatprep.subr.mxu0 0.0
    %92 = vmatpush1.msra.mxu0 0.0
    %93 = vmatprep.subr.mxu0 0.0
    %94 = vmatpush1.msra.mxu0 0.0
    %95 = vmatprep.subr.mxu0 0.0
    %96 = vmatpush1.msra.mxu0 0.0
    %97 = vmatprep.subr.mxu0 0.0
    %98 = vmatpush1.msra.mxu0 0.0
    %99 = vmatprep.subr.mxu0 0.0
    %100 = vmatpush1.msra.mxu0 0.0
    %101 = vmatprep.subr.mxu0 0.0
    %102 = vmatpush1.msra.mxu0 0.0
    %103 = vmatprep.subr.mxu0 0.0
    %104 = vmatpush1.msra.mxu0 0.0
    %105 = vmatprep.subr.mxu0 0.0
    %106 = vmatpush1.msra.mxu0 0.0
    %107 = vmatprep.subr.mxu0 0.0
    %108 = vmatpush1.msra.mxu0 0.0
    %109 = vmatprep.subr.mxu0 0.0
    %110 = vmatpush1.msra.mxu0 0.0
    %111 = vmatprep.subr.mxu0 0.0
    %112 = vmatpush1.msra.mxu0 0.0
    %113 = vmatprep.subr.mxu0 0.0
    %114 = vmatpush1.msra.mxu0 0.0
    %115 = vmatprep.subr.mxu0 0.0
    %116 = vmatpush1.msra.mxu0 0.0
    %117 = vmatprep.subr.mxu0 0.0
    %118 = vmatpush1.msra.mxu0 0.0
    %119 = vmatprep.subr.mxu0 0.0
    %120 = vmatpush1.msra.mxu0 0.0
    %121 = vmatprep.subr.mxu0 0.0
    %122 = vmatpush1.msra.mxu0 0.0
    %123 = vmatprep.subr.mxu0 0.0
    %124 = vmatpush1.msra.mxu0 0.0
    %125 = vmatprep.subr.mxu0 0.0
    %126 = vmatpush1.msra.mxu0 0.0
    %127 = vmatprep.subr.mxu0 0.0
    %128 = vmatpush1.msra.mxu0 0.0
    %129 = vmatprep.mubr.f32.mxu0 0.0
    %130 = vmatmul.mubr.f32.gmra.mrb[0].mxu0 %v60
    %v131 = vpop.f32.mrb[0].mxu0
    %v132 = vadd.f32 0.0, %v131
    %v133 = vpop.f32.mrb[0].mxu0
    %134 = vmatprep.mubr.f32.mxu0 0.0
    %135 = vmatmul.mubr.f32.gmra.mrb[0].mxu0 %v63
    %v136 = vpop.f32.mrb[0].mxu0
    %v137 = vadd.f32 0.0, %v136
    %v138 = vpop.f32.mrb[0].mxu0
    %139 = vdwg.mxu0
    %v140 = vmul.f32 %v132, %v50
    %v141 = vmul.f32 %v137, %v51
    %v142 = vsel %vm58, %v140, 0.0
    %143 = vadd.xlane.f32.xlu0 %v142
    %v144 = vpop.xlane.xlu0 %143
    %vm145 = vcmask 254976
    %v146 = vsel %vm145, %v141, 0.0
    %147 = vadd.xlane.f32.xlu0 %v146
    %v148 = vpop.xlane.xlu0 %147
    %v149 = vmul.f32 %v144, 0.25
    %v150 = vmul.f32 %v148, 0.25
    %v153 = vlaneseq
    %v154 = vand.u32 %v153, 127
    %v155 = vlaneseq
    %v156 = vshrl.u32 %v155, 7
    %v157 = vsub.s32 %v154, %v156
    %v158 = vrot.slane %v149, %v157
    %v159 = vadd.s32 %v154, 4294967288
    %v160 = vlaneseq
    %v161 = vshrl.u32 %v160, 7
    %v162 = vsub.s32 %v159, %v161
    %v163 = vrot.slane %v150, %v162
    %vm164 = vcmask 130112
    %v165 = vsel %vm164, %v163, %v158
    %vm167 = vcmask 73728
    %168 = vst.msk [vmem:[%s3] sm:$0x1] %vm167, %v165
    %s169 = sld [smem:[#allocation2 + $0x1]]
    %s170 = scalar_lea.vmem %s1, %s169
    %v171 = vld [vmem:[%s170] sm:$0x1]
    %v172 = vlaneseq
    %v173 = vshrl.u32 %v172, 7
    %v174 = vsub.s32 0, %v173
    %v175 = vrot.slane %v171, %v174
    %v176 = vsub.f32 %v41, %v175
    %v177 = vsub.f32 %v42, %v175
    %s178 = smul.u32 %s169, 32
    %s179 = scalar_lea.vmem [#allocation5], %s178
    %v180 = vld [vmem:[%s179] sm:$0xff]
    %v181 = vld [vmem:[%s179 + $0x8] sm:$0xff]
    %v182 = vld [vmem:[%s179 + $0x10] sm:$0xff]
    %v183 = vld [vmem:[%s179 + $0x18] sm:$0xff]
    %v185 = vsel %vm58, %v176, 0
    %v188 = vsel %vm58, %v177, 0
    %190 = vmatprep.subr.mxu0 0.0
    %191 = vmatpush1.msra.mxu0 %v180
    %192 = vmatprep.subr.mxu0 0.0
    %193 = vmatpush1.msra.mxu0 %v181
    %194 = vmatprep.subr.mxu0 0.0
    %195 = vmatpush1.msra.mxu0 %v182
    %196 = vmatprep.subr.mxu0 0.0
    %197 = vmatpush1.msra.mxu0 %v183
    %198 = vmatprep.subr.mxu0 0.0
    %199 = vmatpush1.msra.mxu0 0.0
    %200 = vmatprep.subr.mxu0 0.0
    %201 = vmatpush1.msra.mxu0 0.0
    %202 = vmatprep.subr.mxu0 0.0
    %203 = vmatpush1.msra.mxu0 0.0
    %204 = vmatprep.subr.mxu0 0.0
    %205 = vmatpush1.msra.mxu0 0.0
    %206 = vmatprep.subr.mxu0 0.0
    %207 = vmatpush1.msra.mxu0 0.0
    %208 = vmatprep.subr.mxu0 0.0
    %209 = vmatpush1.msra.mxu0 0.0
    %210 = vmatprep.subr.mxu0 0.0
    %211 = vmatpush1.msra.mxu0 0.0
    %212 = vmatprep.subr.mxu0 0.0
    %213 = vmatpush1.msra.mxu0 0.0
    %214 = vmatprep.subr.mxu0 0.0
    %215 = vmatpush1.msra.mxu0 0.0
    %216 = vmatprep.subr.mxu0 0.0
    %217 = vmatpush1.msra.mxu0 0.0
    %218 = vmatprep.subr.mxu0 0.0
    %219 = vmatpush1.msra.mxu0 0.0
    %220 = vmatprep.subr.mxu0 0.0
    %221 = vmatpush1.msra.mxu0 0.0
    %222 = vmatprep.subr.mxu0 0.0
    %223 = vmatpush1.msra.mxu0 0.0
    %224 = vmatprep.subr.mxu0 0.0
    %225 = vmatpush1.msra.mxu0 0.0
    %226 = vmatprep.subr.mxu0 0.0
    %227 = vmatpush1.msra.mxu0 0.0
    %228 = vmatprep.subr.mxu0 0.0
    %229 = vmatpush1.msra.mxu0 0.0
    %230 = vmatprep.subr.mxu0 0.0
    %231 = vmatpush1.msra.mxu0 0.0
    %232 = vmatprep.subr.mxu0 0.0
    %233 = vmatpush1.msra.mxu0 0.0
    %234 = vmatprep.subr.mxu0 0.0
    %235 = vmatpush1.msra.mxu0 0.0
    %236 = vmatprep.subr.mxu0 0.0
    %237 = vmatpush1.msra.mxu0 0.0
    %238 = vmatprep.subr.mxu0 0.0
    %239 = vmatpush1.msra.mxu0 0.0
    %240 = vmatprep.subr.mxu0 0.0
    %241 = vmatpush1.msra.mxu0 0.0
    %242 = vmatprep.subr.mxu0 0.0
    %243 = vmatpush1.msra.mxu0 0.0
    %244 = vmatprep.subr.mxu0 0.0
    %245 = vmatpush1.msra.mxu0 0.0
    %246 = vmatprep.subr.mxu0 0.0
    %247 = vmatpush1.msra.mxu0 0.0
    %248 = vmatprep.subr.mxu0 0.0
    %249 = vmatpush1.msra.mxu0 0.0
    %250 = vmatprep.subr.mxu0 0.0
    %251 = vmatpush1.msra.mxu0 0.0
    %252 = vmatprep.subr.mxu0 0.0
    %253 = vmatpush1.msra.mxu0 0.0
    %254 = vmatprep.mubr.f32.mxu0 0.0
    %255 = vmatmul.mubr.f32.gmra.mrb[0].mxu0 %v185
    %v256 = vpop.f32.mrb[0].mxu0
    %v257 = vadd.f32 0.0, %v256
    %v258 = vpop.f32.mrb[0].mxu0
    %259 = vmatprep.mubr.f32.mxu0 0.0
    %260 = vmatmul.mubr.f32.gmra.mrb[0].mxu0 %v188
    %v261 = vpop.f32.mrb[0].mxu0
    %v262 = vadd.f32 0.0, %v261
    %v263 = vpop.f32.mrb[0].mxu0
    %264 = vdwg.mxu0
    %v265 = vmul.f32 %v257, %v176
    %v266 = vmul.f32 %v262, %v177
    %v267 = vsel %vm58, %v265, 0.0
    %268 = vadd.xlane.f32.xlu0 %v267
    %v269 = vpop.xlane.xlu0 %268
    %v270 = vsel %vm145, %v266, 0.0
    %271 = vadd.xlane.f32.xlu0 %v270
    %v272 = vpop.xlane.xlu0 %271
    %v273 = vmul.f32 %v269, 0.25
    %v274 = vmul.f32 %v272, 0.25
    %v277 = vlaneseq
    %v278 = vshrl.u32 %v277, 7
    %v279 = vsub.s32 %v154, %v278
    %v280 = vrot.slane %v273, %v279
    %v281 = vlaneseq
    %v282 = vshrl.u32 %v281, 7
    %v283 = vsub.s32 %v159, %v282
    %v284 = vrot.slane %v274, %v283
    %v285 = vsel %vm164, %v284, %v280
    %287 = vst.msk [vmem:[%s3 + $0x1] sm:$0x1] %vm167, %v285
    %s288 = sld [smem:[#allocation2 + $0x2]]
    %s289 = scalar_lea.vmem %s1, %s288
    %v290 = vld [vmem:[%s289] sm:$0x1]
    %v291 = vlaneseq
    %v292 = vshrl.u32 %v291, 7
    %v293 = vsub.s32 0, %v292
    %v294 = vrot.slane %v290, %v293
    %v295 = vsub.f32 %v41, %v294
    %v296 = vsub.f32 %v42, %v294
    %s297 = smul.u32 %s288, 32
    %s298 = scalar_lea.vmem [#allocation5], %s297
    %v299 = vld [vmem:[%s298] sm:$0xff]
    %v300 = vld [vmem:[%s298 + $0x8] sm:$0xff]
    %v301 = vld [vmem:[%s298 + $0x10] sm:$0xff]
    %v302 = vld [vmem:[%s298 + $0x18] sm:$0xff]
    %v304 = vsel %vm58, %v295, 0
    %v307 = vsel %vm58, %v296, 0
    %309 = vmatprep.subr.mxu0 0.0
    %310 = vmatpush1.msra.mxu0 %v299
    %311 = vmatprep.subr.mxu0 0.0
    %312 = vmatpush1.msra.mxu0 %v300
    %313 = vmatprep.subr.mxu0 0.0
    %314 = vmatpush1.msra.mxu0 %v301
    %315 = vmatprep.subr.mxu0 0.0
    %316 = vmatpush1.msra.mxu0 %v302
    %317 = vmatprep.subr.mxu0 0.0
    %318 = vmatpush1.msra.mxu0 0.0
    %319 = vmatprep.subr.mxu0 0.0
    %320 = vmatpush1.msra.mxu0 0.0
    %321 = vmatprep.subr.mxu0 0.0
    %322 = vmatpush1.msra.mxu0 0.0
    %323 = vmatprep.subr.mxu0 0.0
    %324 = vmatpush1.msra.mxu0 0.0
    %325 = vmatprep.subr.mxu0 0.0
    %326 = vmatpush1.msra.mxu0 0.0
    %327 = vmatprep.subr.mxu0 0.0
    %328 = vmatpush1.msra.mxu0 0.0
    %329 = vmatprep.subr.mxu0 0.0
    %330 = vmatpush1.msra.mxu0 0.0
    %331 = vmatprep.subr.mxu0 0.0
    %332 = vmatpush1.msra.mxu0 0.0
    %333 = vmatprep.subr.mxu0 0.0
    %334 = vmatpush1.msra.mxu0 0.0
    %335 = vmatprep.subr.mxu0 0.0
    %336 = vmatpush1.msra.mxu0 0.0
    %337 = vmatprep.subr.mxu0 0.0
    %338 = vmatpush1.msra.mxu0 0.0
    %339 = vmatprep.subr.mxu0 0.0
    %340 = vmatpush1.msra.mxu0 0.0
    %341 = vmatprep.subr.mxu0 0.0
    %342 = vmatpush1.msra.mxu0 0.0
    %343 = vmatprep.subr.mxu0 0.0
    %344 = vmatpush1.msra.mxu0 0.0
    %345 = vmatprep.subr.mxu0 0.0
    %346 = vmatpush1.msra.mxu0 0.0
    %347 = vmatprep.subr.mxu0 0.0
    %348 = vmatpush1.msra.mxu0 0.0
    %349 = vmatprep.subr.mxu0 0.0
    %350 = vmatpush1.msra.mxu0 0.0
    %351 = vmatprep.subr.mxu0 0.0
    %352 = vmatpush1.msra.mxu0 0.0
    %353 = vmatprep.subr.mxu0 0.0
    %354 = vmatpush1.msra.mxu0 0.0
    %355 = vmatprep.subr.mxu0 0.0
    %356 = vmatpush1.msra.mxu0 0.0
    %357 = vmatprep.subr.mxu0 0.0
    %358 = vmatpush1.msra.mxu0 0.0
    %359 = vmatprep.subr.mxu0 0.0
    %360 = vmatpush1.msra.mxu0 0.0
    %361 = vmatprep.subr.mxu0 0.0
    %362 = vmatpush1.msra.mxu0 0.0
    %363 = vmatprep.subr.mxu0 0.0
    %364 = vmatpush1.msra.mxu0 0.0
    %365 = vmatprep.subr.mxu0 0.0
    %366 = vmatpush1.msra.mxu0 0.0
    %367 = vmatprep.subr.mxu0 0.0
    %368 = vmatpush1.msra.mxu0 0.0
    %369 = vmatprep.subr.mxu0 0.0
    %370 = vmatpush1.msra.mxu0 0.0
    %371 = vmatprep.subr.mxu0 0.0
    %372 = vmatpush1.msra.mxu0 0.0
    %373 = vmatprep.mubr.f32.mxu0 0.0
    %374 = vmatmul.mubr.f32.gmra.mrb[0].mxu0 %v304
    %v375 = vpop.f32.mrb[0].mxu0
    %v376 = vadd.f32 0.0, %v375
    %v377 = vpop.f32.mrb[0].mxu0
    %378 = vmatprep.mubr.f32.mxu0 0.0
    %379 = vmatmul.mubr.f32.gmra.mrb[0].mxu0 %v307
    %v380 = vpop.f32.mrb[0].mxu0
    %v381 = vadd.f32 0.0, %v380
    %v382 = vpop.f32.mrb[0].mxu0
    %383 = vdwg.mxu0
    %v384 = vmul.f32 %v376, %v295
    %v385 = vmul.f32 %v381, %v296
    %v386 = vsel %vm58, %v384, 0.0
    %387 = vadd.xlane.f32.xlu0 %v386
    %v388 = vpop.xlane.xlu0 %387
    %v389 = vsel %vm145, %v385, 0.0
    %390 = vadd.xlane.f32.xlu0 %v389
    %v391 = vpop.xlane.xlu0 %390
    %v392 = vmul.f32 %v388, 0.25
    %v393 = vmul.f32 %v391, 0.25
    %v396 = vlaneseq
    %v397 = vshrl.u32 %v396, 7
    %v398 = vsub.s32 %v154, %v397
    %v399 = vrot.slane %v392, %v398
    %v400 = vlaneseq
    %v401 = vshrl.u32 %v400, 7
    %v402 = vsub.s32 %v159, %v401
    %v403 = vrot.slane %v393, %v402
    %v404 = vsel %vm164, %v403, %v399
    %406 = vst.msk [vmem:[%s3 + $0x2] sm:$0x1] %vm167, %v404
    %s407 = sld [smem:[#allocation2 + $0x3]]
    %s408 = scalar_lea.vmem %s1, %s407
    %v409 = vld [vmem:[%s408] sm:$0x1]
    %v410 = vlaneseq
    %v411 = vshrl.u32 %v410, 7
    %v412 = vsub.s32 0, %v411
    %v413 = vrot.slane %v409, %v412
    %v414 = vsub.f32 %v41, %v413
    %v415 = vsub.f32 %v42, %v413
    %s416 = smul.u32 %s407, 32
    %s417 = scalar_lea.vmem [#allocation5], %s416
    %v418 = vld [vmem:[%s417] sm:$0xff]
    %v419 = vld [vmem:[%s417 + $0x8] sm:$0xff]
    %v420 = vld [vmem:[%s417 + $0x10] sm:$0xff]
    %v421 = vld [vmem:[%s417 + $0x18] sm:$0xff]
    %v423 = vsel %vm58, %v414, 0
    %v426 = vsel %vm58, %v415, 0
    %428 = vmatprep.subr.mxu0 0.0
    %429 = vmatpush1.msra.mxu0 %v418
    %430 = vmatprep.subr.mxu0 0.0
    %431 = vmatpush1.msra.mxu0 %v419
    %432 = vmatprep.subr.mxu0 0.0
    %433 = vmatpush1.msra.mxu0 %v420
    %434 = vmatprep.subr.mxu0 0.0
    %435 = vmatpush1.msra.mxu0 %v421
    %436 = vmatprep.subr.mxu0 0.0
    %437 = vmatpush1.msra.mxu0 0.0
    %438 = vmatprep.subr.mxu0 0.0
    %439 = vmatpush1.msra.mxu0 0.0
    %440 = vmatprep.subr.mxu0 0.0
    %441 = vmatpush1.msra.mxu0 0.0
    %442 = vmatprep.subr.mxu0 0.0
    %443 = vmatpush1.msra.mxu0 0.0
    %444 = vmatprep.subr.mxu0 0.0
    %445 = vmatpush1.msra.mxu0 0.0
    %446 = vmatprep.subr.mxu0 0.0
    %447 = vmatpush1.msra.mxu0 0.0
    %448 = vmatprep.subr.mxu0 0.0
    %449 = vmatpush1.msra.mxu0 0.0
    %450 = vmatprep.subr.mxu0 0.0
    %451 = vmatpush1.msra.mxu0 0.0
    %452 = vmatprep.subr.mxu0 0.0
    %453 = vmatpush1.msra.mxu0 0.0
    %454 = vmatprep.subr.mxu0 0.0
    %455 = vmatpush1.msra.mxu0 0.0
    %456 = vmatprep.subr.mxu0 0.0
    %457 = vmatpush1.msra.mxu0 0.0
    %458 = vmatprep.subr.mxu0 0.0
    %459 = vmatpush1.msra.mxu0 0.0
    %460 = vmatprep.subr.mxu0 0.0
    %461 = vmatpush1.msra.mxu0 0.0
    %462 = vmatprep.subr.mxu0 0.0
    %463 = vmatpush1.msra.mxu0 0.0
    %464 = vmatprep.subr.mxu0 0.0
    %465 = vmatpush1.msra.mxu0 0.0
    %466 = vmatprep.subr.mxu0 0.0
    %467 = vmatpush1.msra.mxu0 0.0
    %468 = vmatprep.subr.mxu0 0.0
    %469 = vmatpush1.msra.mxu0 0.0
    %470 = vmatprep.subr.mxu0 0.0
    %471 = vmatpush1.msra.mxu0 0.0
    %472 = vmatprep.subr.mxu0 0.0
    %473 = vmatpush1.msra.mxu0 0.0
    %474 = vmatprep.subr.mxu0 0.0
    %475 = vmatpush1.msra.mxu0 0.0
    %476 = vmatprep.subr.mxu0 0.0
    %477 = vmatpush1.msra.mxu0 0.0
    %478 = vmatprep.subr.mxu0 0.0
    %479 = vmatpush1.msra.mxu0 0.0
    %480 = vmatprep.subr.mxu0 0.0
    %481 = vmatpush1.msra.mxu0 0.0
    %482 = vmatprep.subr.mxu0 0.0
    %483 = vmatpush1.msra.mxu0 0.0
    %484 = vmatprep.subr.mxu0 0.0
    %485 = vmatpush1.msra.mxu0 0.0
    %486 = vmatprep.subr.mxu0 0.0
    %487 = vmatpush1.msra.mxu0 0.0
    %488 = vmatprep.subr.mxu0 0.0
    %489 = vmatpush1.msra.mxu0 0.0
    %490 = vmatprep.subr.mxu0 0.0
    %491 = vmatpush1.msra.mxu0 0.0
    %492 = vmatprep.mubr.f32.mxu0 0.0
    %493 = vmatmul.mubr.f32.gmra.mrb[0].mxu0 %v423
    %v494 = vpop.f32.mrb[0].mxu0
    %v495 = vadd.f32 0.0, %v494
    %v496 = vpop.f32.mrb[0].mxu0
    %497 = vmatprep.mubr.f32.mxu0 0.0
    %498 = vmatmul.mubr.f32.gmra.mrb[0].mxu0 %v426
    %v499 = vpop.f32.mrb[0].mxu0
    %v500 = vadd.f32 0.0, %v499
    %v501 = vpop.f32.mrb[0].mxu0
    %502 = vdwg.mxu0
    %v503 = vmul.f32 %v495, %v414
    %v504 = vmul.f32 %v500, %v415
    %v505 = vsel %vm58, %v503, 0.0
    %506 = vadd.xlane.f32.xlu0 %v505
    %v507 = vpop.xlane.xlu0 %506
    %v508 = vsel %vm145, %v504, 0.0
    %509 = vadd.xlane.f32.xlu0 %v508
    %v510 = vpop.xlane.xlu0 %509
    %v511 = vmul.f32 %v507, 0.25
    %v512 = vmul.f32 %v510, 0.25
    %v515 = vlaneseq
    %v516 = vshrl.u32 %v515, 7
    %v517 = vsub.s32 %v154, %v516
    %v518 = vrot.slane %v511, %v517
    %v519 = vlaneseq
    %v520 = vshrl.u32 %v519, 7
    %v521 = vsub.s32 %v159, %v520
    %v522 = vrot.slane %v512, %v521
    %v523 = vsel %vm164, %v522, %v518
    %525 = vst.msk [vmem:[%s3 + $0x3] sm:$0x1] %vm167, %v523
    %s526 = sld [smem:[#allocation2 + $0x4]]
    %s527 = scalar_lea.vmem %s1, %s526
    %v528 = vld [vmem:[%s527] sm:$0x1]
    %v529 = vlaneseq
    %v530 = vshrl.u32 %v529, 7
    %v531 = vsub.s32 0, %v530
    %v532 = vrot.slane %v528, %v531
    %v533 = vsub.f32 %v41, %v532
    %v534 = vsub.f32 %v42, %v532
    %s535 = smul.u32 %s526, 32
    %s536 = scalar_lea.vmem [#allocation5], %s535
    %v537 = vld [vmem:[%s536] sm:$0xff]
    %v538 = vld [vmem:[%s536 + $0x8] sm:$0xff]
    %v539 = vld [vmem:[%s536 + $0x10] sm:$0xff]
    %v540 = vld [vmem:[%s536 + $0x18] sm:$0xff]
    %v542 = vsel %vm58, %v533, 0
    %v545 = vsel %vm58, %v534, 0
    %547 = vmatprep.subr.mxu0 0.0
    %548 = vmatpush1.msra.mxu0 %v537
    %549 = vmatprep.subr.mxu0 0.0
    %550 = vmatpush1.msra.mxu0 %v538
    %551 = vmatprep.subr.mxu0 0.0
    %552 = vmatpush1.msra.mxu0 %v539
    %553 = vmatprep.subr.mxu0 0.0
    %554 = vmatpush1.msra.mxu0 %v540
    %555 = vmatprep.subr.mxu0 0.0
    %556 = vmatpush1.msra.mxu0 0.0
    %557 = vmatprep.subr.mxu0 0.0
    %558 = vmatpush1.msra.mxu0 0.0
    %559 = vmatprep.subr.mxu0 0.0
    %560 = vmatpush1.msra.mxu0 0.0
    %561 = vmatprep.subr.mxu0 0.0
    %562 = vmatpush1.msra.mxu0 0.0
    %563 = vmatprep.subr.mxu0 0.0
    %564 = vmatpush1.msra.mxu0 0.0
    %565 = vmatprep.subr.mxu0 0.0
    %566 = vmatpush1.msra.mxu0 0.0
    %567 = vmatprep.subr.mxu0 0.0
    %568 = vmatpush1.msra.mxu0 0.0
    %569 = vmatprep.subr.mxu0 0.0
    %570 = vmatpush1.msra.mxu0 0.0
    %571 = vmatprep.subr.mxu0 0.0
    %572 = vmatpush1.msra.mxu0 0.0
    %573 = vmatprep.subr.mxu0 0.0
    %574 = vmatpush1.msra.mxu0 0.0
    %575 = vmatprep.subr.mxu0 0.0
    %576 = vmatpush1.msra.mxu0 0.0
    %577 = vmatprep.subr.mxu0 0.0
    %578 = vmatpush1.msra.mxu0 0.0
    %579 = vmatprep.subr.mxu0 0.0
    %580 = vmatpush1.msra.mxu0 0.0
    %581 = vmatprep.subr.mxu0 0.0
    %582 = vmatpush1.msra.mxu0 0.0
    %583 = vmatprep.subr.mxu0 0.0
    %584 = vmatpush1.msra.mxu0 0.0
    %585 = vmatprep.subr.mxu0 0.0
    %586 = vmatpush1.msra.mxu0 0.0
    %587 = vmatprep.subr.mxu0 0.0
    %588 = vmatpush1.msra.mxu0 0.0
    %589 = vmatprep.subr.mxu0 0.0
    %590 = vmatpush1.msra.mxu0 0.0
    %591 = vmatprep.subr.mxu0 0.0
    %592 = vmatpush1.msra.mxu0 0.0
    %593 = vmatprep.subr.mxu0 0.0
    %594 = vmatpush1.msra.mxu0 0.0
    %595 = vmatprep.subr.mxu0 0.0
    %596 = vmatpush1.msra.mxu0 0.0
    %597 = vmatprep.subr.mxu0 0.0
    %598 = vmatpush1.msra.mxu0 0.0
    %599 = vmatprep.subr.mxu0 0.0
    %600 = vmatpush1.msra.mxu0 0.0
    %601 = vmatprep.subr.mxu0 0.0
    %602 = vmatpush1.msra.mxu0 0.0
    %603 = vmatprep.subr.mxu0 0.0
    %604 = vmatpush1.msra.mxu0 0.0
    %605 = vmatprep.subr.mxu0 0.0
    %606 = vmatpush1.msra.mxu0 0.0
    %607 = vmatprep.subr.mxu0 0.0
    %608 = vmatpush1.msra.mxu0 0.0
    %609 = vmatprep.subr.mxu0 0.0
    %610 = vmatpush1.msra.mxu0 0.0
    %611 = vmatprep.mubr.f32.mxu0 0.0
    %612 = vmatmul.mubr.f32.gmra.mrb[0].mxu0 %v542
    %v613 = vpop.f32.mrb[0].mxu0
    %v614 = vadd.f32 0.0, %v613
    %v615 = vpop.f32.mrb[0].mxu0
    %616 = vmatprep.mubr.f32.mxu0 0.0
    %617 = vmatmul.mubr.f32.gmra.mrb[0].mxu0 %v545
    %v618 = vpop.f32.mrb[0].mxu0
    %v619 = vadd.f32 0.0, %v618
    %v620 = vpop.f32.mrb[0].mxu0
    %621 = vdwg.mxu0
    %v622 = vmul.f32 %v614, %v533
    %v623 = vmul.f32 %v619, %v534
    %v624 = vsel %vm58, %v622, 0.0
    %625 = vadd.xlane.f32.xlu0 %v624
    %v626 = vpop.xlane.xlu0 %625
    %v627 = vsel %vm145, %v623, 0.0
    %628 = vadd.xlane.f32.xlu0 %v627
    %v629 = vpop.xlane.xlu0 %628
    %v630 = vmul.f32 %v626, 0.25
    %v631 = vmul.f32 %v629, 0.25
    %v634 = vlaneseq
    %v635 = vshrl.u32 %v634, 7
    %v636 = vsub.s32 %v154, %v635
    %v637 = vrot.slane %v630, %v636
    %v638 = vlaneseq
    %v639 = vshrl.u32 %v638, 7
    %v640 = vsub.s32 %v159, %v639
    %v641 = vrot.slane %v631, %v640
    %v642 = vsel %vm164, %v641, %v637
    %644 = vst.msk [vmem:[%s3 + $0x4] sm:$0x1] %vm167, %v642
    %s645 = sld [smem:[#allocation2 + $0x5]]
    %s646 = scalar_lea.vmem %s1, %s645
    %v647 = vld [vmem:[%s646] sm:$0x1]
    %v648 = vlaneseq
    %v649 = vshrl.u32 %v648, 7
    %v650 = vsub.s32 0, %v649
    %v651 = vrot.slane %v647, %v650
    %v652 = vsub.f32 %v41, %v651
    %v653 = vsub.f32 %v42, %v651
    %s654 = smul.u32 %s645, 32
    %s655 = scalar_lea.vmem [#allocation5], %s654
    %v656 = vld [vmem:[%s655] sm:$0xff]
    %v657 = vld [vmem:[%s655 + $0x8] sm:$0xff]
    %v658 = vld [vmem:[%s655 + $0x10] sm:$0xff]
    %v659 = vld [vmem:[%s655 + $0x18] sm:$0xff]
    %v661 = vsel %vm58, %v652, 0
    %v664 = vsel %vm58, %v653, 0
    %666 = vmatprep.subr.mxu0 0.0
    %667 = vmatpush1.msra.mxu0 %v656
    %668 = vmatprep.subr.mxu0 0.0
    %669 = vmatpush1.msra.mxu0 %v657
    %670 = vmatprep.subr.mxu0 0.0
    %671 = vmatpush1.msra.mxu0 %v658
    %672 = vmatprep.subr.mxu0 0.0
    %673 = vmatpush1.msra.mxu0 %v659
    %674 = vmatprep.subr.mxu0 0.0
    %675 = vmatpush1.msra.mxu0 0.0
    %676 = vmatprep.subr.mxu0 0.0
    %677 = vmatpush1.msra.mxu0 0.0
    %678 = vmatprep.subr.mxu0 0.0
    %679 = vmatpush1.msra.mxu0 0.0
    %680 = vmatprep.subr.mxu0 0.0
    %681 = vmatpush1.msra.mxu0 0.0
    %682 = vmatprep.subr.mxu0 0.0
    %683 = vmatpush1.msra.mxu0 0.0
    %684 = vmatprep.subr.mxu0 0.0
    %685 = vmatpush1.msra.mxu0 0.0
    %686 = vmatprep.subr.mxu0 0.0
    %687 = vmatpush1.msra.mxu0 0.0
    %688 = vmatprep.subr.mxu0 0.0
    %689 = vmatpush1.msra.mxu0 0.0
    %690 = vmatprep.subr.mxu0 0.0
    %691 = vmatpush1.msra.mxu0 0.0
    %692 = vmatprep.subr.mxu0 0.0
    %693 = vmatpush1.msra.mxu0 0.0
    %694 = vmatprep.subr.mxu0 0.0
    %695 = vmatpush1.msra.mxu0 0.0
    %696 = vmatprep.subr.mxu0 0.0
    %697 = vmatpush1.msra.mxu0 0.0
    %698 = vmatprep.subr.mxu0 0.0
    %699 = vmatpush1.msra.mxu0 0.0
    %700 = vmatprep.subr.mxu0 0.0
    %701 = vmatpush1.msra.mxu0 0.0
    %702 = vmatprep.subr.mxu0 0.0
    %703 = vmatpush1.msra.mxu0 0.0
    %704 = vmatprep.subr.mxu0 0.0
    %705 = vmatpush1.msra.mxu0 0.0
    %706 = vmatprep.subr.mxu0 0.0
    %707 = vmatpush1.msra.mxu0 0.0
    %708 = vmatprep.subr.mxu0 0.0
    %709 = vmatpush1.msra.mxu0 0.0
    %710 = vmatprep.subr.mxu0 0.0
    %711 = vmatpush1.msra.mxu0 0.0
    %712 = vmatprep.subr.mxu0 0.0
    %713 = vmatpush1.msra.mxu0 0.0
    %714 = vmatprep.subr.mxu0 0.0
    %715 = vmatpush1.msra.mxu0 0.0
    %716 = vmatprep.subr.mxu0 0.0
    %717 = vmatpush1.msra.mxu0 0.0
    %718 = vmatprep.subr.mxu0 0.0
    %719 = vmatpush1.msra.mxu0 0.0
    %720 = vmatprep.subr.mxu0 0.0
    %721 = vmatpush1.msra.mxu0 0.0
    %722 = vmatprep.subr.mxu0 0.0
    %723 = vmatpush1.msra.mxu0 0.0
    %724 = vmatprep.subr.mxu0 0.0
    %725 = vmatpush1.msra.mxu0 0.0
    %726 = vmatprep.subr.mxu0 0.0
    %727 = vmatpush1.msra.mxu0 0.0
    %728 = vmatprep.subr.mxu0 0.0
    %729 = vmatpush1.msra.mxu0 0.0
    %730 = vmatprep.mubr.f32.mxu0 0.0
    %731 = vmatmul.mubr.f32.gmra.mrb[0].mxu0 %v661
    %v732 = vpop.f32.mrb[0].mxu0
    %v733 = vadd.f32 0.0, %v732
    %v734 = vpop.f32.mrb[0].mxu0
    %735 = vmatprep.mubr.f32.mxu0 0.0
    %736 = vmatmul.mubr.f32.gmra.mrb[0].mxu0 %v664
    %v737 = vpop.f32.mrb[0].mxu0
    %v738 = vadd.f32 0.0, %v737
    %v739 = vpop.f32.mrb[0].mxu0
    %740 = vdwg.mxu0
    %v741 = vmul.f32 %v733, %v652
    %v742 = vmul.f32 %v738, %v653
    %v743 = vsel %vm58, %v741, 0.0
    %744 = vadd.xlane.f32.xlu0 %v743
    %v745 = vpop.xlane.xlu0 %744
    %v746 = vsel %vm145, %v742, 0.0
    %747 = vadd.xlane.f32.xlu0 %v746
    %v748 = vpop.xlane.xlu0 %747
    %v749 = vmul.f32 %v745, 0.25
    %v750 = vmul.f32 %v748, 0.25
    %v753 = vlaneseq
    %v754 = vshrl.u32 %v753, 7
    %v755 = vsub.s32 %v154, %v754
    %v756 = vrot.slane %v749, %v755
    %v757 = vlaneseq
    %v758 = vshrl.u32 %v757, 7
    %v759 = vsub.s32 %v159, %v758
    %v760 = vrot.slane %v750, %v759
    %v761 = vsel %vm164, %v760, %v756
    %763 = vst.msk [vmem:[%s3 + $0x5] sm:$0x1] %vm167, %v761
    %s764 = sld [smem:[#allocation2 + $0x6]]
    %s765 = scalar_lea.vmem %s1, %s764
    %v766 = vld [vmem:[%s765] sm:$0x1]
    %v767 = vlaneseq
    %v768 = vshrl.u32 %v767, 7
    %v769 = vsub.s32 0, %v768
    %v770 = vrot.slane %v766, %v769
    %v771 = vsub.f32 %v41, %v770
    %v772 = vsub.f32 %v42, %v770
    %s773 = smul.u32 %s764, 32
    %s774 = scalar_lea.vmem [#allocation5], %s773
    %v775 = vld [vmem:[%s774] sm:$0xff]
    %v776 = vld [vmem:[%s774 + $0x8] sm:$0xff]
    %v777 = vld [vmem:[%s774 + $0x10] sm:$0xff]
    %v778 = vld [vmem:[%s774 + $0x18] sm:$0xff]
    %v780 = vsel %vm58, %v771, 0
    %v783 = vsel %vm58, %v772, 0
    %785 = vmatprep.subr.mxu0 0.0
    %786 = vmatpush1.msra.mxu0 %v775
    %787 = vmatprep.subr.mxu0 0.0
    %788 = vmatpush1.msra.mxu0 %v776
    %789 = vmatprep.subr.mxu0 0.0
    %790 = vmatpush1.msra.mxu0 %v777
    %791 = vmatprep.subr.mxu0 0.0
    %792 = vmatpush1.msra.mxu0 %v778
    %793 = vmatprep.subr.mxu0 0.0
    %794 = vmatpush1.msra.mxu0 0.0
    %795 = vmatprep.subr.mxu0 0.0
    %796 = vmatpush1.msra.mxu0 0.0
    %797 = vmatprep.subr.mxu0 0.0
    %798 = vmatpush1.msra.mxu0 0.0
    %799 = vmatprep.subr.mxu0 0.0
    %800 = vmatpush1.msra.mxu0 0.0
    %801 = vmatprep.subr.mxu0 0.0
    %802 = vmatpush1.msra.mxu0 0.0
    %803 = vmatprep.subr.mxu0 0.0
    %804 = vmatpush1.msra.mxu0 0.0
    %805 = vmatprep.subr.mxu0 0.0
    %806 = vmatpush1.msra.mxu0 0.0
    %807 = vmatprep.subr.mxu0 0.0
    %808 = vmatpush1.msra.mxu0 0.0
    %809 = vmatprep.subr.mxu0 0.0
    %810 = vmatpush1.msra.mxu0 0.0
    %811 = vmatprep.subr.mxu0 0.0
    %812 = vmatpush1.msra.mxu0 0.0
    %813 = vmatprep.subr.mxu0 0.0
    %814 = vmatpush1.msra.mxu0 0.0
    %815 = vmatprep.subr.mxu0 0.0
    %816 = vmatpush1.msra.mxu0 0.0
    %817 = vmatprep.subr.mxu0 0.0
    %818 = vmatpush1.msra.mxu0 0.0
    %819 = vmatprep.subr.mxu0 0.0
    %820 = vmatpush1.msra.mxu0 0.0
    %821 = vmatprep.subr.mxu0 0.0
    %822 = vmatpush1.msra.mxu0 0.0
    %823 = vmatprep.subr.mxu0 0.0
    %824 = vmatpush1.msra.mxu0 0.0
    %825 = vmatprep.subr.mxu0 0.0
    %826 = vmatpush1.msra.mxu0 0.0
    %827 = vmatprep.subr.mxu0 0.0
    %828 = vmatpush1.msra.mxu0 0.0
    %829 = vmatprep.subr.mxu0 0.0
    %830 = vmatpush1.msra.mxu0 0.0
    %831 = vmatprep.subr.mxu0 0.0
    %832 = vmatpush1.msra.mxu0 0.0
    %833 = vmatprep.subr.mxu0 0.0
    %834 = vmatpush1.msra.mxu0 0.0
    %835 = vmatprep.subr.mxu0 0.0
    %836 = vmatpush1.msra.mxu0 0.0
    %837 = vmatprep.subr.mxu0 0.0
    %838 = vmatpush1.msra.mxu0 0.0
    %839 = vmatprep.subr.mxu0 0.0
    %840 = vmatpush1.msra.mxu0 0.0
    %841 = vmatprep.subr.mxu0 0.0
    %842 = vmatpush1.msra.mxu0 0.0
    %843 = vmatprep.subr.mxu0 0.0
    %844 = vmatpush1.msra.mxu0 0.0
    %845 = vmatprep.subr.mxu0 0.0
    %846 = vmatpush1.msra.mxu0 0.0
    %847 = vmatprep.subr.mxu0 0.0
    %848 = vmatpush1.msra.mxu0 0.0
    %849 = vmatprep.mubr.f32.mxu0 0.0
    %850 = vmatmul.mubr.f32.gmra.mrb[0].mxu0 %v780
    %v851 = vpop.f32.mrb[0].mxu0
    %v852 = vadd.f32 0.0, %v851
    %v853 = vpop.f32.mrb[0].mxu0
    %854 = vmatprep.mubr.f32.mxu0 0.0
    %855 = vmatmul.mubr.f32.gmra.mrb[0].mxu0 %v783
    %v856 = vpop.f32.mrb[0].mxu0
    %v857 = vadd.f32 0.0, %v856
    %v858 = vpop.f32.mrb[0].mxu0
    %859 = vdwg.mxu0
    %v860 = vmul.f32 %v852, %v771
    %v861 = vmul.f32 %v857, %v772
    %v862 = vsel %vm58, %v860, 0.0
    %863 = vadd.xlane.f32.xlu0 %v862
    %v864 = vpop.xlane.xlu0 %863
    %v865 = vsel %vm145, %v861, 0.0
    %866 = vadd.xlane.f32.xlu0 %v865
    %v867 = vpop.xlane.xlu0 %866
    %v868 = vmul.f32 %v864, 0.25
    %v869 = vmul.f32 %v867, 0.25
    %v872 = vlaneseq
    %v873 = vshrl.u32 %v872, 7
    %v874 = vsub.s32 %v154, %v873
    %v875 = vrot.slane %v868, %v874
    %v876 = vlaneseq
    %v877 = vshrl.u32 %v876, 7
    %v878 = vsub.s32 %v159, %v877
    %v879 = vrot.slane %v869, %v878
    %v880 = vsel %vm164, %v879, %v875
    %882 = vst.msk [vmem:[%s3 + $0x6] sm:$0x1] %vm167, %v880
    %s883 = sld [smem:[#allocation2 + $0x7]]
    %s884 = scalar_lea.vmem %s1, %s883
    %v885 = vld [vmem:[%s884] sm:$0x1]
    %v886 = vlaneseq
    %v887 = vshrl.u32 %v886, 7
    %v888 = vsub.s32 0, %v887
    %v889 = vrot.slane %v885, %v888
    %v890 = vsub.f32 %v41, %v889
    %v891 = vsub.f32 %v42, %v889
    %s892 = smul.u32 %s883, 32
    %s893 = scalar_lea.vmem [#allocation5], %s892
    %v894 = vld [vmem:[%s893] sm:$0xff]
    %v895 = vld [vmem:[%s893 + $0x8] sm:$0xff]
    %v896 = vld [vmem:[%s893 + $0x10] sm:$0xff]
    %v897 = vld [vmem:[%s893 + $0x18] sm:$0xff]
    %v899 = vsel %vm58, %v890, 0
    %v902 = vsel %vm58, %v891, 0
    %904 = vmatprep.subr.mxu0 0.0
    %905 = vmatpush1.msra.mxu0 %v894
    %906 = vmatprep.subr.mxu0 0.0
    %907 = vmatpush1.msra.mxu0 %v895
    %908 = vmatprep.subr.mxu0 0.0
    %909 = vmatpush1.msra.mxu0 %v896
    %910 = vmatprep.subr.mxu0 0.0
    %911 = vmatpush1.msra.mxu0 %v897
    %912 = vmatprep.subr.mxu0 0.0
    %913 = vmatpush1.msra.mxu0 0.0
    %914 = vmatprep.subr.mxu0 0.0
    %915 = vmatpush1.msra.mxu0 0.0
    %916 = vmatprep.subr.mxu0 0.0
    %917 = vmatpush1.msra.mxu0 0.0
    %918 = vmatprep.subr.mxu0 0.0
    %919 = vmatpush1.msra.mxu0 0.0
    %920 = vmatprep.subr.mxu0 0.0
    %921 = vmatpush1.msra.mxu0 0.0
    %922 = vmatprep.subr.mxu0 0.0
    %923 = vmatpush1.msra.mxu0 0.0
    %924 = vmatprep.subr.mxu0 0.0
    %925 = vmatpush1.msra.mxu0 0.0
    %926 = vmatprep.subr.mxu0 0.0
    %927 = vmatpush1.msra.mxu0 0.0
    %928 = vmatprep.subr.mxu0 0.0
    %929 = vmatpush1.msra.mxu0 0.0
    %930 = vmatprep.subr.mxu0 0.0
    %931 = vmatpush1.msra.mxu0 0.0
    %932 = vmatprep.subr.mxu0 0.0
    %933 = vmatpush1.msra.mxu0 0.0
    %934 = vmatprep.subr.mxu0 0.0
    %935 = vmatpush1.msra.mxu0 0.0
    %936 = vmatprep.subr.mxu0 0.0
    %937 = vmatpush1.msra.mxu0 0.0
    %938 = vmatprep.subr.mxu0 0.0
    %939 = vmatpush1.msra.mxu0 0.0
    %940 = vmatprep.subr.mxu0 0.0
    %941 = vmatpush1.msra.mxu0 0.0
    %942 = vmatprep.subr.mxu0 0.0
    %943 = vmatpush1.msra.mxu0 0.0
    %944 = vmatprep.subr.mxu0 0.0
    %945 = vmatpush1.msra.mxu0 0.0
    %946 = vmatprep.subr.mxu0 0.0
    %947 = vmatpush1.msra.mxu0 0.0
    %948 = vmatprep.subr.mxu0 0.0
    %949 = vmatpush1.msra.mxu0 0.0
    %950 = vmatprep.subr.mxu0 0.0
    %951 = vmatpush1.msra.mxu0 0.0
    %952 = vmatprep.subr.mxu0 0.0
    %953 = vmatpush1.msra.mxu0 0.0
    %954 = vmatprep.subr.mxu0 0.0
    %955 = vmatpush1.msra.mxu0 0.0
    %956 = vmatprep.subr.mxu0 0.0
    %957 = vmatpush1.msra.mxu0 0.0
    %958 = vmatprep.subr.mxu0 0.0
    %959 = vmatpush1.msra.mxu0 0.0
    %960 = vmatprep.subr.mxu0 0.0
    %961 = vmatpush1.msra.mxu0 0.0
    %962 = vmatprep.subr.mxu0 0.0
    %963 = vmatpush1.msra.mxu0 0.0
    %964 = vmatprep.subr.mxu0 0.0
    %965 = vmatpush1.msra.mxu0 0.0
    %966 = vmatprep.subr.mxu0 0.0
    %967 = vmatpush1.msra.mxu0 0.0
    %968 = vmatprep.mubr.f32.mxu0 0.0
    %969 = vmatmul.mubr.f32.gmra.mrb[0].mxu0 %v899
    %v970 = vpop.f32.mrb[0].mxu0
    %v971 = vadd.f32 0.0, %v970
    %v972 = vpop.f32.mrb[0].mxu0
    %973 = vmatprep.mubr.f32.mxu0 0.0
    %974 = vmatmul.mubr.f32.gmra.mrb[0].mxu0 %v902
    %v975 = vpop.f32.mrb[0].mxu0
    %v976 = vadd.f32 0.0, %v975
    %v977 = vpop.f32.mrb[0].mxu0
    %978 = vdwg.mxu0
    %v979 = vmul.f32 %v971, %v890
    %v980 = vmul.f32 %v976, %v891
    %v981 = vsel %vm58, %v979, 0.0
    %982 = vadd.xlane.f32.xlu0 %v981
    %v983 = vpop.xlane.xlu0 %982
    %v984 = vsel %vm145, %v980, 0.0
    %985 = vadd.xlane.f32.xlu0 %v984
    %v986 = vpop.xlane.xlu0 %985
    %v987 = vmul.f32 %v983, 0.25
    %v988 = vmul.f32 %v986, 0.25
    %v991 = vlaneseq
    %v992 = vshrl.u32 %v991, 7
    %v993 = vsub.s32 %v154, %v992
    %v994 = vrot.slane %v987, %v993
    %v995 = vlaneseq
    %v996 = vshrl.u32 %v995, 7
    %v997 = vsub.s32 %v159, %v996
    %v998 = vrot.slane %v988, %v997
    %v999 = vsel %vm164, %v998, %v994
    %1001 = vst.msk [vmem:[%s3 + $0x7] sm:$0x1] %vm167, %v999
    // Predicated region
    $region22: #{isda_forward.3} parent=1 // pred_check
      _
    $region23: #{isda_forward.3} parent=1 // pred_check_branch
      %1003 = sbr.rel (0) target = $region25
    $region24: #{isda_forward.3} parent=1 // pred_region
      _
    $region25: #{isda_forward.3} parent=1 // pred_fallthru
      _
    // Predicated region
    $region26: #{isda_forward.3} parent=1 // pred_check
      _
    $region27: #{isda_forward.3} parent=1 // pred_check_branch
      %1005 = sbr.rel (0) target = $region29
    $region28: #{isda_forward.3} parent=1 // pred_region
      _
    $region29: #{isda_forward.3} parent=1 // pred_fallthru
      _
    %1006 = vsyncpa [#allocation3], 1
    %1007 = vsyncpa [#allocation4], 1

</llo_original>
